<compile_context>
chip_gen: v6e
topology: v6e:2x2x1
jax: 0.10.0
libtpu: 0.0.40
codegen_flags: <defaults>
</compile_context>

<pallas_src>
import jax
import jax.numpy as jnp
from jax.experimental import pallas as pl
from jax.experimental.pallas import tpu as pltpu


def _conv1x1_kernel(w_ref, x_ref, o_ref):
    # w_ref: [tco, Cin] f32, x_ref: [Cin, HW] f32, o_ref: [tco, HW] f32.
    # In-kernel bf16 cast (VPU work hidden under the DMA), then a single
    # full-K MXU matmul with f32 accumulation straight into the output block.
    w = w_ref[...].astype(jnp.bfloat16)
    x = x_ref[...].astype(jnp.bfloat16)
    o_ref[...] = jnp.dot(w, x, preferred_element_type=jnp.float32)


def _choose_split(cout: int):
    """Pick (nco, use_core_parallel) for the Cout grid axis.

    v7x has 2 TensorCores per chip -> 4 blocks (2 per core: core split AND
    intra-core double buffering).  v5e/v6e (1 TC) -> 2 blocks purely so the
    weight DMA / MXU / f32 writeback overlap across grid steps.
    """
    kind = ""
    try:
        kind = jax.devices()[0].device_kind.lower()
    except Exception:  # non-TPU backend / AOT: fall through to generic choice
        pass
    is_v7 = ("v7" in kind) or ("7x" in kind)
    if is_v7 and cout % 4 == 0 and (cout // 4) % 8 == 0:
        return 4, True
    if cout % 2 == 0 and (cout // 2) % 8 == 0:
        return 2, False
    return 1, False


def conv1x1_pallas(x_nchw, weight_oi, nco=None):
    """1x1 conv, stride 1, no bias.

    x_nchw:    [N, Cin, H, W] float32
    weight_oi: [Cout, Cin]    float32 (the (1,1) kernel dims already squeezed)
    nco:       optional static override for the number of Cout blocks.
    returns    [N, Cout, H, W] float32
    """
    N, Cin, H, W = x_nchw.shape
    Cout = weight_oi.shape[0]
    HW = H * W

    if nco is None:
        nco, core_parallel = _choose_split(Cout)
    else:
        core_parallel = False
    tco = Cout // nco

    # Free (row-major compatible) reshape; NO dtype change in the wrapper.
    x = x_nchw.reshape(N, Cin, HW)

    def call(dim_sem):
        return pl.pallas_call(
            _conv1x1_kernel,
            out_shape=jax.ShapeDtypeStruct((N, Cout, HW), jnp.float32),
            grid_spec=pltpu.PrefetchScalarGridSpec(
                num_scalar_prefetch=0,
                grid=(N, nco),
                in_specs=[
                    # weight block [tco, Cin]
                    pl.BlockSpec((tco, Cin), lambda n, c: (c, 0)),
                    # activations [Cin, HW] (batch dim squeezed); index is
                    # constant across the Cout axis, so X is fetched once per
                    # batch element and stays resident across Cout blocks.
                    pl.BlockSpec((None, Cin, HW), lambda n, c: (n, 0, 0)),
                ],
                out_specs=pl.BlockSpec((None, tco, HW), lambda n, c: (n, c, 0)),
            ),
            compiler_params=pltpu.CompilerParams(
                dimension_semantics=dim_sem,
            ),
        )(weight_oi, x)

    if core_parallel:
        # Split the Cout axis across the two v7x TensorCores; fall back to
        # plain parallel semantics if this lowering is rejected.
        try:
            out = jax.block_until_ready(
                call((pltpu.ARBITRARY, pltpu.CORE_PARALLEL))
            )
        except Exception:
            out = call(("parallel", "parallel"))
    else:
        out = call(("parallel", "parallel"))

    return out.reshape(N, Cout, H, W)


if __name__ == "__main__":
    key = jax.random.PRNGKey(0)
    kx, kw = jax.random.split(key)

    # Shapes implied by the module: Conv2d(1024 -> 512, k=1), input [1,1024,14,14]
    N, Cin, H, W, Cout = 1, 1024, 14, 14, 512
    x = jax.random.normal(kx, (N, Cin, H, W), dtype=jnp.float32)
    # Deterministic synthetic weight (kaiming-ish scale), shape [Cout, Cin]
    weight = jax.random.normal(kw, (Cout, Cin), dtype=jnp.float32) * (1.0 / jnp.sqrt(Cin))

    y = conv1x1_pallas(x, weight)
    y = jax.block_until_ready(y)
    assert y.shape == (N, Cout, H, W)

    # Kernel-exact reference: bf16 inputs, f32 accumulation (what the kernel computes).
    ref_bf16 = jnp.einsum(
        "oc,nchw->nohw",
        weight.astype(jnp.bfloat16),
        x.astype(jnp.bfloat16),
        preferred_element_type=jnp.float32,
    )
    assert jnp.allclose(y, ref_bf16, atol=2e-3, rtol=2e-3), float(
        jnp.max(jnp.abs(y - ref_bf16)))

    # Sanity vs. the full-f32 Conv2d semantics (difference = bf16 input rounding only).
    ref_f32 = jnp.einsum("oc,nchw->nohw", weight, x)
    assert jnp.allclose(y, ref_f32, atol=5e-2, rtol=5e-2), float(
        jnp.max(jnp.abs(y - ref_f32)))

    print("KERNEL_OK")
</pallas_src>

<mosaic_0001>
module attributes {stable_mosaic.version = 11 : i64} {
  func.func @_conv1x1_kernel(%arg0: i32, %arg1: i32, %arg2: memref<256x1024xf32, #tpu.memory_space<vmem>>, %arg3: memref<1x1024x196xf32, #tpu.memory_space<vmem>>, %arg4: memref<1x256x196xf32, #tpu.memory_space<vmem>>) attributes {dimension_semantics = [#tpu.dimension_semantics<parallel>, #tpu.dimension_semantics<parallel>], iteration_bounds = array<i64: 1, 2>, scalar_prefetch = 0 : i64, scratch_operands = 0 : i64, tpu.core_type = #tpu.core_type<tc>, window_params = [{transform_indices = @transform_0, window_bounds = array<i64: 256, 1024>}, {transform_indices = @transform_1, window_bounds = array<i64: 1, 1024, 196>}, {transform_indices = @transform_2, window_bounds = array<i64: 1, 256, 196>}]} {
    %c0 = arith.constant 0 : index
    %c0_0 = arith.constant 0 : index
    %0 = vector.load %arg2[%c0, %c0_0] : memref<256x1024xf32, #tpu.memory_space<vmem>>, vector<256x1024xf32>
    %1 = arith.truncf %0 : vector<256x1024xf32> to vector<256x1024xbf16>
    %c0_1 = arith.constant 0 : index
    %c0_2 = arith.constant 0 : index
    %c0_3 = arith.constant 0 : index
    %2 = vector.load %arg3[%c0_1, %c0_2, %c0_3] : memref<1x1024x196xf32, #tpu.memory_space<vmem>>, vector<1x1024x196xf32>
    %3 = vector.shape_cast %2 : vector<1x1024x196xf32> to vector<1024x196xf32>
    %4 = arith.truncf %3 : vector<1024x196xf32> to vector<1024x196xbf16>
    %cst = arith.constant dense<0.000000e+00> : vector<256x196xf32>
    %5 = tpu.matmul %1, %4, %cst {dimension_numbers = #tpu.dot_dimension_numbers<[1], [0], [0], [1], [0, 0, 1, 1], [], []>} : vector<256x1024xbf16>, vector<1024x196xbf16>, vector<256x196xf32> -> vector<256x196xf32>
    %c0_4 = arith.constant 0 : index
    %c0_5 = arith.constant 0 : index
    %c0_6 = arith.constant 0 : index
    %6 = vector.load %arg4[%c0_4, %c0_5, %c0_6] : memref<1x256x196xf32, #tpu.memory_space<vmem>>, vector<1x256x196xf32>
    %7 = vector.shape_cast %6 : vector<1x256x196xf32> to vector<256x196xf32>
    %8 = vector.shape_cast %5 : vector<256x196xf32> to vector<1x256x196xf32>
    tpu.vector_store %arg4[%c0_4, %c0_5, %c0_6], %8 {strides = array<i32>} : memref<1x256x196xf32, #tpu.memory_space<vmem>>, vector<1x256x196xf32>,
    return
  }
  func.func @transform_0(%arg0: i32, %arg1: i32) -> (i32, i32) {
    %c0_i32 = arith.constant 0 : i32
    %c0_i32_0 = arith.constant 0 : i32
    return %arg1, %c0_i32 : i32, i32
  }
  func.func @transform_1(%arg0: i32, %arg1: i32) -> (i32, i32, i32) {
    %c0_i32 = arith.constant 0 : i32
    %c0_i32_0 = arith.constant 0 : i32
    %c0_i32_1 = arith.constant 0 : i32
    return %arg0, %c0_i32, %c0_i32_0 : i32, i32, i32
  }
  func.func @transform_2(%arg0: i32, %arg1: i32) -> (i32, i32, i32) {
    %c0_i32 = arith.constant 0 : i32
    %c0_i32_0 = arith.constant 0 : i32
    return %arg0, %arg1, %c0_i32 : i32, i32, i32
  }
}

</mosaic_0001>

<llo_original>
// kernel: tpu_custom_call.1
$region0: #{tpu_custom_call.1}
  #allocation0 [shape = 'u32[]', space=smem, size = 0x4, offset = 0x4, fixed_abs, tag = 'smem constant byte address 0x4 - core index']
  #allocation1 [shape = 'u32[144,128]{1,0:T(1,128)}', space=vmem, size = 0x12000, scoped, tag = 'internal scratch']
  %s0 = inlined_call_operand.hbm [shape: f32[512,1024], index: 0, kind: input, shape index: {}]
  %s1 = inlined_call_operand.vmem [shape: f32[1,1024,196], index: 1, kind: input, shape index: {}]
  %s2 = inlined_call_operand.vmem [shape: f32[1,512,196], index: 2, kind: output, shape index: {}]
  %s3 = sld [smem:[#allocation0]]
  $region45: #{tpu_custom_call.1} parent=0
    _
  %s5 = ssub.s32 1, %s3
  %s6 = scalar_select 0, %s5, %s3
  $region1: #{tpu_custom_call.1} parent=0
    #allocation2 [shape = 'u8[2097152]{0}', space=vmem, size = 0x200000, scoped, tag = 'input window, operand 0']
    #allocation3 [shape = 's32[2]{0}', space=sflag, size = 0x8, scoped, tag = 'scoped memory for tpu_custom_call.1']
    %7 = vsyncpa [#allocation3], 0
    %s8 = scalar_lea.sflag [#allocation3], 1
    %9 = vsyncpa %s8, 0
    loop: start=0, step=1, limit=4
    $region2: #{tpu_custom_call.1} parent=1 // loop_pre_header
      _
    $region3: #{tpu_custom_call.1} parent=1 // loop_header
      %s11 = sphi 0, %s15
      %p12 = scmp.ge.s32.totalorder %s11, 4
      %s18 = sphi 0, %s30
      %s19 = sphi 0, %s26
      %s20 = sphi 0, %s18
      %s21 = sphi 0, %s19
      %s22 = sphi 0, %s20
      %s23 = sphi 0, %s21
      %s33 = sphi 0, %s35
      %s36 = sphi 0, %s33
      %s37 = sphi 0, %s36
      %s53 = sphi 0, %s37
      %s59 = sphi 0, %s61
      %s62 = sphi 0, %s59
      %s63 = sphi 0, %s62
      %s79 = sphi 0, %s63
      %s87 = sphi 0, %s89
      %s90 = sphi 0, %s87
      %s91 = sphi 0, %s90
      %s107 = sphi 0, %s91
    $region4: #{tpu_custom_call.1} parent=1 // loop_header_branch
      %14 = sbr.rel (%p12) target = $region8
    $region5: #{tpu_custom_call.1} parent=1 // loop_body
      %s16 = ssub.s32 %s11, 1
      %s17 = ssub.s32 %s11, 2
      %s24 = sadd.s32 1, %s19
      %p25 = scmp.ge.s32.totalorder %s24, 2
      %s26 = scalar_select %p25, 0, %s24
      %s27 = sadd.s32 1, %s18
      %s28 = scalar_select %p25, %s27, %s18
      %p29 = scmp.ge.s32.totalorder %s28, 1
      %s30 = scalar_select %p29, 0, %s28
      %s31 = ssub.s32 %s19, %s26
      %p32 = scmp.eq.s32.totalorder %s31, 0
      %s34 = sadd.s32 %s33, 1
      %s35 = scalar_select %p32, %s33, %s34
      %p38 = pneg %p32
      %p39 = scmp.eq.s32.totalorder %s11, 1
      %p40 = por %p38, %p39
      %p41 = scmp.ne.s32.totalorder %s33, %s36
      %p42 = scmp.eq.s32.totalorder %s11, 0
      %p43 = por %p41, %p42
      %p44 = scmp.ne.s32.totalorder %s33, %s36
      %p45 = scmp.eq.s32.totalorder %s16, 1
      %p46 = por %p44, %p45
      %p47 = scmp.ne.s32.totalorder %s36, %s37
      %p48 = scmp.eq.s32.totalorder %s16, 0
      %p49 = por %p47, %p48
      %p50 = scmp.ne.s32.totalorder %s36, %s37
      %p51 = scmp.eq.s32.totalorder %s17, 1
      %p52 = por %p50, %p51
      %p54 = scmp.ne.s32.totalorder %s37, %s53
      %p55 = scmp.eq.s32.totalorder %s17, 0
      %p56 = por %p54, %p55
      %s57 = ssub.s32 %s18, %s30
      %p58 = scmp.eq.s32.totalorder %s57, 0
      %s60 = sadd.s32 %s59, 1
      %s61 = scalar_select %p58, %s59, %s60
      %p64 = pneg %p58
      %p65 = scmp.eq.s32.totalorder %s11, 1
      %p66 = por %p64, %p65
      %p67 = scmp.ne.s32.totalorder %s59, %s62
      %p68 = scmp.eq.s32.totalorder %s11, 0
      %p69 = por %p67, %p68
      %p70 = scmp.ne.s32.totalorder %s59, %s62
      %p71 = scmp.eq.s32.totalorder %s16, 1
      %p72 = por %p70, %p71
      %p73 = scmp.ne.s32.totalorder %s62, %s63
      %p74 = scmp.eq.s32.totalorder %s16, 0
      %p75 = por %p73, %p74
      %p76 = scmp.ne.s32.totalorder %s62, %s63
      %p77 = scmp.eq.s32.totalorder %s17, 1
      %p78 = por %p76, %p77
      %p80 = scmp.ne.s32.totalorder %s63, %s79
      %p81 = scmp.eq.s32.totalorder %s17, 0
      %p82 = por %p80, %p81
      %s83 = ssub.s32 %s18, %s30
      %s84 = ssub.s32 %s19, %s26
      %s85 = sor.u32 %s83, %s84
      %p86 = scmp.eq.s32.totalorder %s85, 0
      %s88 = sadd.s32 %s87, 1
      %s89 = scalar_select %p86, %s87, %s88
      %p92 = pneg %p86
      %p93 = scmp.eq.s32.totalorder %s11, 1
      %p94 = por %p92, %p93
      %p95 = scmp.ne.s32.totalorder %s87, %s90
      %p96 = scmp.eq.s32.totalorder %s11, 0
      %p97 = por %p95, %p96
      %p98 = scmp.ne.s32.totalorder %s87, %s90
      %p99 = scmp.eq.s32.totalorder %s16, 1
      %p100 = por %p98, %p99
      %p101 = scmp.ne.s32.totalorder %s90, %s91
      %p102 = scmp.eq.s32.totalorder %s16, 0
      %p103 = por %p101, %p102
      %p104 = scmp.ne.s32.totalorder %s90, %s91
      %p105 = scmp.eq.s32.totalorder %s17, 1
      %p106 = por %p104, %p105
      %p108 = scmp.ne.s32.totalorder %s91, %s107
      %p109 = scmp.eq.s32.totalorder %s17, 0
      %p110 = por %p108, %p109
      %p111 = scmp.le.s32.totalorder 1, %s11
      %p112 = scmp.lt.s32.totalorder %s11, 3
      %p113 = pnand %p111, %p112
      %p114 = pneg %p113
      // Predicated region
      $region9: #{tpu_custom_call.1} parent=5 // pred_check
        _
      $region10: #{tpu_custom_call.1} parent=5 // pred_check_branch
        %116 = sbr.rel (%p113) target = $region12
      $region11: #{tpu_custom_call.1} parent=5 // pred_region
        %s117 = ssub.s32 %s11, 1
        // Predicated region
        $region13: #{tpu_custom_call.1} parent=11 // pred_check
          %p118 = pneg %p75
        $region14: #{tpu_custom_call.1} parent=11 // pred_check_branch
          %120 = sbr.rel (%p118) target = $region16
        $region15: #{tpu_custom_call.1} parent=11 // pred_region
          %p121 = scmp.lt.s32.totalorder %s20, 0
          %s122 = scalar_select %p121, %s20, 0
          %s123 = smul.addr %s122, 256
          %s124 = smul.addr %s123, 8
          %s125 = scalar_lea.vmem %s1, %s124
        $region16: #{tpu_custom_call.1} parent=11 // pred_fallthru
          _
      $region12: #{tpu_custom_call.1} parent=5 // pred_fallthru
        _
      %p126 = scmp.lt.s32.totalorder %s11, 2
      // Predicated region
      $region17: #{tpu_custom_call.1} parent=5 // pred_check
        %p127 = pneg %p126
      $region18: #{tpu_custom_call.1} parent=5 // pred_check_branch
        %129 = sbr.rel (%p127) target = $region20
      $region19: #{tpu_custom_call.1} parent=5 // pred_region
        // Predicated region
        $region21: #{tpu_custom_call.1} parent=19 // pred_check
          %p130 = pneg %p43
        $region22: #{tpu_custom_call.1} parent=19 // pred_check_branch
          %132 = sbr.rel (%p130) target = $region24
        $region23: #{tpu_custom_call.1} parent=19 // pred_region
          %s133 = sand.u32 %s33, 1
          %s134 = scalar_lea.sflag [#allocation3], %s133
          %s135 = sand.u32 %s33, 1
          %s136 = smul.addr %s135, 2048
          %s137 = scalar_lea.vmem [#allocation2], %s136
          %s138 = smul.u32 32, %s19
          %s140 = ssub.s32 32768, 32768
          %141 = vsyncadd %s134, %s140
          %s142 = smul.addr %s138, 8
          %s143 = smul.addr %s142, 128
          %s144 = scalar_lea.hbm %s0, %s143
          %s145 = sshll.u32 %s137, 4
          %s146 = int_to_ptr.vmem [resolvable:$true] %s145
          %151 = dma.hbm_to_vmem [thread:$0]  %s144, 32768, %s146, %s134, 1024, 1024, 64
        $region24: #{tpu_custom_call.1} parent=19 // pred_fallthru
          _
      $region20: #{tpu_custom_call.1} parent=5 // pred_fallthru
        _
      %p152 = scmp.le.s32.totalorder 1, %s11
      %p153 = scmp.lt.s32.totalorder %s11, 3
      %p154 = pnand %p152, %p153
      %p155 = pneg %p154
      // Predicated region
      $region25: #{tpu_custom_call.1} parent=5 // pred_check
        _
      $region26: #{tpu_custom_call.1} parent=5 // pred_check_branch
        %157 = sbr.rel (%p154) target = $region28
      $region27: #{tpu_custom_call.1} parent=5 // pred_region
        %s158 = ssub.s32 %s11, 1
        %s159 = sand.u32 %s36, 1
        %s160 = scalar_lea.sflag [#allocation3], %s159
        %s161 = sand.u32 %s36, 1
        %s162 = smul.addr %s161, 2048
        %s163 = scalar_lea.vmem [#allocation2], %s162
        // Predicated region
        $region29: #{tpu_custom_call.1} parent=27 // pred_check
          %p164 = pneg %p49
        $region30: #{tpu_custom_call.1} parent=27 // pred_check_branch
          %166 = sbr.rel (%p164) target = $region32
        $region31: #{tpu_custom_call.1} parent=27 // pred_region
          %167 = dma.done %s160, 32768
        $region32: #{tpu_custom_call.1} parent=27 // pred_fallthru
          _
        %s168 = sand.u32 %s36, 1
        %s169 = scalar_lea.sflag [#allocation3], %s168
        %s170 = sand.u32 %s36, 1
        %s171 = smul.addr %s170, 2048
        %s172 = scalar_lea.vmem [#allocation2], %s171
        %p173 = pneg %p49
        %p174 = pneg %p46
        %p175 = scmp.lt.s32.totalorder %s20, 0
        %s176 = scalar_select %p175, %s20, 0
        %s177 = smul.addr %s176, 256
        %s178 = smul.addr %s177, 8
        %s179 = scalar_lea.vmem %s1, %s178
        %p180 = pneg %p75
        %p181 = pneg %p72
        %p182 = pneg %p103
        %p183 = pneg %p100
        %s184 = smul.u32 32, %s21
        %p185 = scmp.lt.s32.totalorder %s20, 0
        %s186 = scalar_select %p185, %s20, 0
        %p187 = scmp.lt.s32.totalorder %s184, 63
        %s188 = scalar_select %p187, %s184, 63
        %s189 = smul.addr %s188, 2
        %s190 = smul.addr %s186, 128
        %s191 = sadd.s32 %s189, %s190
        %s192 = smul.addr %s191, 8
        %s193 = scalar_lea.vmem %s2, %s192
        %s194 = smul.u32 32, %s21
        %p195 = scmp.lt.s32.totalorder %s20, 0
        %s196 = scalar_select %p195, %s20, 0
        %s197 = smul.addr %s196, 256
        %s198 = smul.addr %s197, 8
        %s199 = scalar_lea.vmem %s1, %s198
        %s200 = smul.u32 32, %s21
        %p201 = scmp.lt.s32.totalorder %s20, 0
        %s202 = scalar_select %p201, %s20, 0
        %p203 = scmp.lt.s32.totalorder %s200, 63
        %s204 = scalar_select %p203, %s200, 63
        %s205 = smul.addr %s204, 2
        %s206 = smul.addr %s202, 128
        %s207 = sadd.s32 %s205, %s206
        %s208 = smul.addr %s207, 8
        %s209 = scalar_lea.vmem %s2, %s208
        %s210 = smul.u32 32, %s21
        %v211 = vld [vmem:[%s163] sm:$0xff]
        %v212 = vld [vmem:[%s163 + $0x8] sm:$0xff]
        %v213 = vld [vmem:[%s163 + $0x10] sm:$0xff]
        %v214 = vld [vmem:[%s163 + $0x18] sm:$0xff]
        %v215 = vld [vmem:[%s163 + $0x20] sm:$0xff]
        %v216 = vld [vmem:[%s163 + $0x28] sm:$0xff]
        %v217 = vld [vmem:[%s163 + $0x30] sm:$0xff]
        %v218 = vld [vmem:[%s163 + $0x38] sm:$0xff]
        %v219 = vld [vmem:[%s163 + $0x40] sm:$0xff]
        %v220 = vld [vmem:[%s163 + $0x48] sm:$0xff]
        %v221 = vld [vmem:[%s163 + $0x50] sm:$0xff]
        %v222 = vld [vmem:[%s163 + $0x58] sm:$0xff]
        %v223 = vld [vmem:[%s163 + $0x60] sm:$0xff]
        %v224 = vld [vmem:[%s163 + $0x68] sm:$0xff]
        %v225 = vld [vmem:[%s163 + $0x70] sm:$0xff]
        %v226 = vld [vmem:[%s163 + $0x78] sm:$0xff]
        %v227 = vld [vmem:[%s163 + $0x80] sm:$0xff]
        %v228 = vld [vmem:[%s163 + $0x88] sm:$0xff]
        %v229 = vld [vmem:[%s163 + $0x90] sm:$0xff]
        %v230 = vld [vmem:[%s163 + $0x98] sm:$0xff]
        %v231 = vld [vmem:[%s163 + $0xa0] sm:$0xff]
        %v232 = vld [vmem:[%s163 + $0xa8] sm:$0xff]
        %v233 = vld [vmem:[%s163 + $0xb0] sm:$0xff]
        %v234 = vld [vmem:[%s163 + $0xb8] sm:$0xff]
        %v235 = vld [vmem:[%s163 + $0xc0] sm:$0xff]
        %v236 = vld [vmem:[%s163 + $0xc8] sm:$0xff]
        %v237 = vld [vmem:[%s163 + $0xd0] sm:$0xff]
        %v238 = vld [vmem:[%s163 + $0xd8] sm:$0xff]
        %v239 = vld [vmem:[%s163 + $0xe0] sm:$0xff]
        %v240 = vld [vmem:[%s163 + $0xe8] sm:$0xff]
        %v241 = vld [vmem:[%s163 + $0xf0] sm:$0xff]
        %v242 = vld [vmem:[%s163 + $0xf8] sm:$0xff]
        %v243 = vld [vmem:[%s163 + $0x100] sm:$0xff]
        %v244 = vld [vmem:[%s163 + $0x108] sm:$0xff]
        %v245 = vld [vmem:[%s163 + $0x110] sm:$0xff]
        %v246 = vld [vmem:[%s163 + $0x118] sm:$0xff]
        %v247 = vld [vmem:[%s163 + $0x120] sm:$0xff]
        %v248 = vld [vmem:[%s163 + $0x128] sm:$0xff]
        %v249 = vld [vmem:[%s163 + $0x130] sm:$0xff]
        %v250 = vld [vmem:[%s163 + $0x138] sm:$0xff]
        %v251 = vld [vmem:[%s163 + $0x140] sm:$0xff]
        %v252 = vld [vmem:[%s163 + $0x148] sm:$0xff]
        %v253 = vld [vmem:[%s163 + $0x150] sm:$0xff]
        %v254 = vld [vmem:[%s163 + $0x158] sm:$0xff]
        %v255 = vld [vmem:[%s163 + $0x160] sm:$0xff]
        %v256 = vld [vmem:[%s163 + $0x168] sm:$0xff]
        %v257 = vld [vmem:[%s163 + $0x170] sm:$0xff]
        %v258 = vld [vmem:[%s163 + $0x178] sm:$0xff]
        %v259 = vld [vmem:[%s163 + $0x180] sm:$0xff]
        %v260 = vld [vmem:[%s163 + $0x188] sm:$0xff]
        %v261 = vld [vmem:[%s163 + $0x190] sm:$0xff]
        %v262 = vld [vmem:[%s163 + $0x198] sm:$0xff]
        %v263 = vld [vmem:[%s163 + $0x1a0] sm:$0xff]
        %v264 = vld [vmem:[%s163 + $0x1a8] sm:$0xff]
        %v265 = vld [vmem:[%s163 + $0x1b0] sm:$0xff]
        %v266 = vld [vmem:[%s163 + $0x1b8] sm:$0xff]
        %v267 = vld [vmem:[%s163 + $0x1c0] sm:$0xff]
        %v268 = vld [vmem:[%s163 + $0x1c8] sm:$0xff]
        %v269 = vld [vmem:[%s163 + $0x1d0] sm:$0xff]
        %v270 = vld [vmem:[%s163 + $0x1d8] sm:$0xff]
        %v271 = vld [vmem:[%s163 + $0x1e0] sm:$0xff]
        %v272 = vld [vmem:[%s163 + $0x1e8] sm:$0xff]
        %v273 = vld [vmem:[%s163 + $0x1f0] sm:$0xff]
        %v274 = vld [vmem:[%s163 + $0x1f8] sm:$0xff]
        %v275 = vld [vmem:[%s163 + $0x200] sm:$0xff]
        %v276 = vld [vmem:[%s163 + $0x208] sm:$0xff]
        %v277 = vld [vmem:[%s163 + $0x210] sm:$0xff]
        %v278 = vld [vmem:[%s163 + $0x218] sm:$0xff]
        %v279 = vld [vmem:[%s163 + $0x220] sm:$0xff]
        %v280 = vld [vmem:[%s163 + $0x228] sm:$0xff]
        %v281 = vld [vmem:[%s163 + $0x230] sm:$0xff]
        %v282 = vld [vmem:[%s163 + $0x238] sm:$0xff]
        %v283 = vld [vmem:[%s163 + $0x240] sm:$0xff]
        %v284 = vld [vmem:[%s163 + $0x248] sm:$0xff]
        %v285 = vld [vmem:[%s163 + $0x250] sm:$0xff]
        %v286 = vld [vmem:[%s163 + $0x258] sm:$0xff]
        %v287 = vld [vmem:[%s163 + $0x260] sm:$0xff]
        %v288 = vld [vmem:[%s163 + $0x268] sm:$0xff]
        %v289 = vld [vmem:[%s163 + $0x270] sm:$0xff]
        %v290 = vld [vmem:[%s163 + $0x278] sm:$0xff]
        %v291 = vld [vmem:[%s163 + $0x280] sm:$0xff]
        %v292 = vld [vmem:[%s163 + $0x288] sm:$0xff]
        %v293 = vld [vmem:[%s163 + $0x290] sm:$0xff]
        %v294 = vld [vmem:[%s163 + $0x298] sm:$0xff]
        %v295 = vld [vmem:[%s163 + $0x2a0] sm:$0xff]
        %v296 = vld [vmem:[%s163 + $0x2a8] sm:$0xff]
        %v297 = vld [vmem:[%s163 + $0x2b0] sm:$0xff]
        %v298 = vld [vmem:[%s163 + $0x2b8] sm:$0xff]
        %v299 = vld [vmem:[%s163 + $0x2c0] sm:$0xff]
        %v300 = vld [vmem:[%s163 + $0x2c8] sm:$0xff]
        %v301 = vld [vmem:[%s163 + $0x2d0] sm:$0xff]
        %v302 = vld [vmem:[%s163 + $0x2d8] sm:$0xff]
        %v303 = vld [vmem:[%s163 + $0x2e0] sm:$0xff]
        %v304 = vld [vmem:[%s163 + $0x2e8] sm:$0xff]
        %v305 = vld [vmem:[%s163 + $0x2f0] sm:$0xff]
        %v306 = vld [vmem:[%s163 + $0x2f8] sm:$0xff]
        %v307 = vld [vmem:[%s163 + $0x300] sm:$0xff]
        %v308 = vld [vmem:[%s163 + $0x308] sm:$0xff]
        %v309 = vld [vmem:[%s163 + $0x310] sm:$0xff]
        %v310 = vld [vmem:[%s163 + $0x318] sm:$0xff]
        %v311 = vld [vmem:[%s163 + $0x320] sm:$0xff]
        %v312 = vld [vmem:[%s163 + $0x328] sm:$0xff]
        %v313 = vld [vmem:[%s163 + $0x330] sm:$0xff]
        %v314 = vld [vmem:[%s163 + $0x338] sm:$0xff]
        %v315 = vld [vmem:[%s163 + $0x340] sm:$0xff]
        %v316 = vld [vmem:[%s163 + $0x348] sm:$0xff]
        %v317 = vld [vmem:[%s163 + $0x350] sm:$0xff]
        %v318 = vld [vmem:[%s163 + $0x358] sm:$0xff]
        %v319 = vld [vmem:[%s163 + $0x360] sm:$0xff]
        %v320 = vld [vmem:[%s163 + $0x368] sm:$0xff]
        %v321 = vld [vmem:[%s163 + $0x370] sm:$0xff]
        %v322 = vld [vmem:[%s163 + $0x378] sm:$0xff]
        %v323 = vld [vmem:[%s163 + $0x380] sm:$0xff]
        %v324 = vld [vmem:[%s163 + $0x388] sm:$0xff]
        %v325 = vld [vmem:[%s163 + $0x390] sm:$0xff]
        %v326 = vld [vmem:[%s163 + $0x398] sm:$0xff]
        %v327 = vld [vmem:[%s163 + $0x3a0] sm:$0xff]
        %v328 = vld [vmem:[%s163 + $0x3a8] sm:$0xff]
        %v329 = vld [vmem:[%s163 + $0x3b0] sm:$0xff]
        %v330 = vld [vmem:[%s163 + $0x3b8] sm:$0xff]
        %v331 = vld [vmem:[%s163 + $0x3c0] sm:$0xff]
        %v332 = vld [vmem:[%s163 + $0x3c8] sm:$0xff]
        %v333 = vld [vmem:[%s163 + $0x3d0] sm:$0xff]
        %v334 = vld [vmem:[%s163 + $0x3d8] sm:$0xff]
        %v335 = vld [vmem:[%s163 + $0x3e0] sm:$0xff]
        %v336 = vld [vmem:[%s163 + $0x3e8] sm:$0xff]
        %v337 = vld [vmem:[%s163 + $0x3f0] sm:$0xff]
        %v338 = vld [vmem:[%s163 + $0x3f8] sm:$0xff]
        %v339 = vld [vmem:[%s163 + $0x400] sm:$0xff]
        %v340 = vld [vmem:[%s163 + $0x408] sm:$0xff]
        %v341 = vld [vmem:[%s163 + $0x410] sm:$0xff]
        %v342 = vld [vmem:[%s163 + $0x418] sm:$0xff]
        %v343 = vld [vmem:[%s163 + $0x420] sm:$0xff]
        %v344 = vld [vmem:[%s163 + $0x428] sm:$0xff]
        %v345 = vld [vmem:[%s163 + $0x430] sm:$0xff]
        %v346 = vld [vmem:[%s163 + $0x438] sm:$0xff]
        %v347 = vld [vmem:[%s163 + $0x440] sm:$0xff]
        %v348 = vld [vmem:[%s163 + $0x448] sm:$0xff]
        %v349 = vld [vmem:[%s163 + $0x450] sm:$0xff]
        %v350 = vld [vmem:[%s163 + $0x458] sm:$0xff]
        %v351 = vld [vmem:[%s163 + $0x460] sm:$0xff]
        %v352 = vld [vmem:[%s163 + $0x468] sm:$0xff]
        %v353 = vld [vmem:[%s163 + $0x470] sm:$0xff]
        %v354 = vld [vmem:[%s163 + $0x478] sm:$0xff]
        %v355 = vld [vmem:[%s163 + $0x480] sm:$0xff]
        %v356 = vld [vmem:[%s163 + $0x488] sm:$0xff]
        %v357 = vld [vmem:[%s163 + $0x490] sm:$0xff]
        %v358 = vld [vmem:[%s163 + $0x498] sm:$0xff]
        %v359 = vld [vmem:[%s163 + $0x4a0] sm:$0xff]
        %v360 = vld [vmem:[%s163 + $0x4a8] sm:$0xff]
        %v361 = vld [vmem:[%s163 + $0x4b0] sm:$0xff]
        %v362 = vld [vmem:[%s163 + $0x4b8] sm:$0xff]
        %v363 = vld [vmem:[%s163 + $0x4c0] sm:$0xff]
        %v364 = vld [vmem:[%s163 + $0x4c8] sm:$0xff]
        %v365 = vld [vmem:[%s163 + $0x4d0] sm:$0xff]
        %v366 = vld [vmem:[%s163 + $0x4d8] sm:$0xff]
        %v367 = vld [vmem:[%s163 + $0x4e0] sm:$0xff]
        %v368 = vld [vmem:[%s163 + $0x4e8] sm:$0xff]
        %v369 = vld [vmem:[%s163 + $0x4f0] sm:$0xff]
        %v370 = vld [vmem:[%s163 + $0x4f8] sm:$0xff]
        %v371 = vld [vmem:[%s163 + $0x500] sm:$0xff]
        %v372 = vld [vmem:[%s163 + $0x508] sm:$0xff]
        %v373 = vld [vmem:[%s163 + $0x510] sm:$0xff]
        %v374 = vld [vmem:[%s163 + $0x518] sm:$0xff]
        %v375 = vld [vmem:[%s163 + $0x520] sm:$0xff]
        %v376 = vld [vmem:[%s163 + $0x528] sm:$0xff]
        %v377 = vld [vmem:[%s163 + $0x530] sm:$0xff]
        %v378 = vld [vmem:[%s163 + $0x538] sm:$0xff]
        %v379 = vld [vmem:[%s163 + $0x540] sm:$0xff]
        %v380 = vld [vmem:[%s163 + $0x548] sm:$0xff]
        %v381 = vld [vmem:[%s163 + $0x550] sm:$0xff]
        %v382 = vld [vmem:[%s163 + $0x558] sm:$0xff]
        %v383 = vld [vmem:[%s163 + $0x560] sm:$0xff]
        %v384 = vld [vmem:[%s163 + $0x568] sm:$0xff]
        %v385 = vld [vmem:[%s163 + $0x570] sm:$0xff]
        %v386 = vld [vmem:[%s163 + $0x578] sm:$0xff]
        %v387 = vld [vmem:[%s163 + $0x580] sm:$0xff]
        %v388 = vld [vmem:[%s163 + $0x588] sm:$0xff]
        %v389 = vld [vmem:[%s163 + $0x590] sm:$0xff]
        %v390 = vld [vmem:[%s163 + $0x598] sm:$0xff]
        %v391 = vld [vmem:[%s163 + $0x5a0] sm:$0xff]
        %v392 = vld [vmem:[%s163 + $0x5a8] sm:$0xff]
        %v393 = vld [vmem:[%s163 + $0x5b0] sm:$0xff]
        %v394 = vld [vmem:[%s163 + $0x5b8] sm:$0xff]
        %v395 = vld [vmem:[%s163 + $0x5c0] sm:$0xff]
        %v396 = vld [vmem:[%s163 + $0x5c8] sm:$0xff]
        %v397 = vld [vmem:[%s163 + $0x5d0] sm:$0xff]
        %v398 = vld [vmem:[%s163 + $0x5d8] sm:$0xff]
        %v399 = vld [vmem:[%s163 + $0x5e0] sm:$0xff]
        %v400 = vld [vmem:[%s163 + $0x5e8] sm:$0xff]
        %v401 = vld [vmem:[%s163 + $0x5f0] sm:$0xff]
        %v402 = vld [vmem:[%s163 + $0x5f8] sm:$0xff]
        %v403 = vld [vmem:[%s163 + $0x600] sm:$0xff]
        %v404 = vld [vmem:[%s163 + $0x608] sm:$0xff]
        %v405 = vld [vmem:[%s163 + $0x610] sm:$0xff]
        %v406 = vld [vmem:[%s163 + $0x618] sm:$0xff]
        %v407 = vld [vmem:[%s163 + $0x620] sm:$0xff]
        %v408 = vld [vmem:[%s163 + $0x628] sm:$0xff]
        %v409 = vld [vmem:[%s163 + $0x630] sm:$0xff]
        %v410 = vld [vmem:[%s163 + $0x638] sm:$0xff]
        %v411 = vld [vmem:[%s163 + $0x640] sm:$0xff]
        %v412 = vld [vmem:[%s163 + $0x648] sm:$0xff]
        %v413 = vld [vmem:[%s163 + $0x650] sm:$0xff]
        %v414 = vld [vmem:[%s163 + $0x658] sm:$0xff]
        %v415 = vld [vmem:[%s163 + $0x660] sm:$0xff]
        %v416 = vld [vmem:[%s163 + $0x668] sm:$0xff]
        %v417 = vld [vmem:[%s163 + $0x670] sm:$0xff]
        %v418 = vld [vmem:[%s163 + $0x678] sm:$0xff]
        %v419 = vld [vmem:[%s163 + $0x680] sm:$0xff]
        %v420 = vld [vmem:[%s163 + $0x688] sm:$0xff]
        %v421 = vld [vmem:[%s163 + $0x690] sm:$0xff]
        %v422 = vld [vmem:[%s163 + $0x698] sm:$0xff]
        %v423 = vld [vmem:[%s163 + $0x6a0] sm:$0xff]
        %v424 = vld [vmem:[%s163 + $0x6a8] sm:$0xff]
        %v425 = vld [vmem:[%s163 + $0x6b0] sm:$0xff]
        %v426 = vld [vmem:[%s163 + $0x6b8] sm:$0xff]
        %v427 = vld [vmem:[%s163 + $0x6c0] sm:$0xff]
        %v428 = vld [vmem:[%s163 + $0x6c8] sm:$0xff]
        %v429 = vld [vmem:[%s163 + $0x6d0] sm:$0xff]
        %v430 = vld [vmem:[%s163 + $0x6d8] sm:$0xff]
        %v431 = vld [vmem:[%s163 + $0x6e0] sm:$0xff]
        %v432 = vld [vmem:[%s163 + $0x6e8] sm:$0xff]
        %v433 = vld [vmem:[%s163 + $0x6f0] sm:$0xff]
        %v434 = vld [vmem:[%s163 + $0x6f8] sm:$0xff]
        %v435 = vld [vmem:[%s163 + $0x700] sm:$0xff]
        %v436 = vld [vmem:[%s163 + $0x708] sm:$0xff]
        %v437 = vld [vmem:[%s163 + $0x710] sm:$0xff]
        %v438 = vld [vmem:[%s163 + $0x718] sm:$0xff]
        %v439 = vld [vmem:[%s163 + $0x720] sm:$0xff]
        %v440 = vld [vmem:[%s163 + $0x728] sm:$0xff]
        %v441 = vld [vmem:[%s163 + $0x730] sm:$0xff]
        %v442 = vld [vmem:[%s163 + $0x738] sm:$0xff]
        %v443 = vld [vmem:[%s163 + $0x740] sm:$0xff]
        %v444 = vld [vmem:[%s163 + $0x748] sm:$0xff]
        %v445 = vld [vmem:[%s163 + $0x750] sm:$0xff]
        %v446 = vld [vmem:[%s163 + $0x758] sm:$0xff]
        %v447 = vld [vmem:[%s163 + $0x760] sm:$0xff]
        %v448 = vld [vmem:[%s163 + $0x768] sm:$0xff]
        %v449 = vld [vmem:[%s163 + $0x770] sm:$0xff]
        %v450 = vld [vmem:[%s163 + $0x778] sm:$0xff]
        %v451 = vld [vmem:[%s163 + $0x780] sm:$0xff]
        %v452 = vld [vmem:[%s163 + $0x788] sm:$0xff]
        %v453 = vld [vmem:[%s163 + $0x790] sm:$0xff]
        %v454 = vld [vmem:[%s163 + $0x798] sm:$0xff]
        %v455 = vld [vmem:[%s163 + $0x7a0] sm:$0xff]
        %v456 = vld [vmem:[%s163 + $0x7a8] sm:$0xff]
        %v457 = vld [vmem:[%s163 + $0x7b0] sm:$0xff]
        %v458 = vld [vmem:[%s163 + $0x7b8] sm:$0xff]
        %v459 = vld [vmem:[%s163 + $0x7c0] sm:$0xff]
        %v460 = vld [vmem:[%s163 + $0x7c8] sm:$0xff]
        %v461 = vld [vmem:[%s163 + $0x7d0] sm:$0xff]
        %v462 = vld [vmem:[%s163 + $0x7d8] sm:$0xff]
        %v463 = vld [vmem:[%s163 + $0x7e0] sm:$0xff]
        %v464 = vld [vmem:[%s163 + $0x7e8] sm:$0xff]
        %v465 = vld [vmem:[%s163 + $0x7f0] sm:$0xff]
        %v466 = vld [vmem:[%s163 + $0x7f8] sm:$0xff]
        %v467 = vpack.c.bf16 %v219, %v211
        %v468 = vpack.c.bf16 %v220, %v212
        %v469 = vpack.c.bf16 %v221, %v213
        %v470 = vpack.c.bf16 %v222, %v214
        %v471 = vpack.c.bf16 %v223, %v215
        %v472 = vpack.c.bf16 %v224, %v216
        %v473 = vpack.c.bf16 %v225, %v217
        %v474 = vpack.c.bf16 %v226, %v218
        %v475 = vpack.c.bf16 %v235, %v227
        %v476 = vpack.c.bf16 %v236, %v228
        %v477 = vpack.c.bf16 %v237, %v229
        %v478 = vpack.c.bf16 %v238, %v230
        %v479 = vpack.c.bf16 %v239, %v231
        %v480 = vpack.c.bf16 %v240, %v232
        %v481 = vpack.c.bf16 %v241, %v233
        %v482 = vpack.c.bf16 %v242, %v234
        %v483 = vpack.c.bf16 %v251, %v243
        %v484 = vpack.c.bf16 %v252, %v244
        %v485 = vpack.c.bf16 %v253, %v245
        %v486 = vpack.c.bf16 %v254, %v246
        %v487 = vpack.c.bf16 %v255, %v247
        %v488 = vpack.c.bf16 %v256, %v248
        %v489 = vpack.c.bf16 %v257, %v249
        %v490 = vpack.c.bf16 %v258, %v250
        %v491 = vpack.c.bf16 %v267, %v259
        %v492 = vpack.c.bf16 %v268, %v260
        %v493 = vpack.c.bf16 %v269, %v261
        %v494 = vpack.c.bf16 %v270, %v262
        %v495 = vpack.c.bf16 %v271, %v263
        %v496 = vpack.c.bf16 %v272, %v264
        %v497 = vpack.c.bf16 %v273, %v265
        %v498 = vpack.c.bf16 %v274, %v266
        %v499 = vpack.c.bf16 %v283, %v275
        %v500 = vpack.c.bf16 %v284, %v276
        %v501 = vpack.c.bf16 %v285, %v277
        %v502 = vpack.c.bf16 %v286, %v278
        %v503 = vpack.c.bf16 %v287, %v279
        %v504 = vpack.c.bf16 %v288, %v280
        %v505 = vpack.c.bf16 %v289, %v281
        %v506 = vpack.c.bf16 %v290, %v282
        %v507 = vpack.c.bf16 %v299, %v291
        %v508 = vpack.c.bf16 %v300, %v292
        %v509 = vpack.c.bf16 %v301, %v293
        %v510 = vpack.c.bf16 %v302, %v294
        %v511 = vpack.c.bf16 %v303, %v295
        %v512 = vpack.c.bf16 %v304, %v296
        %v513 = vpack.c.bf16 %v305, %v297
        %v514 = vpack.c.bf16 %v306, %v298
        %v515 = vpack.c.bf16 %v315, %v307
        %v516 = vpack.c.bf16 %v316, %v308
        %v517 = vpack.c.bf16 %v317, %v309
        %v518 = vpack.c.bf16 %v318, %v310
        %v519 = vpack.c.bf16 %v319, %v311
        %v520 = vpack.c.bf16 %v320, %v312
        %v521 = vpack.c.bf16 %v321, %v313
        %v522 = vpack.c.bf16 %v322, %v314
        %v523 = vpack.c.bf16 %v331, %v323
        %v524 = vpack.c.bf16 %v332, %v324
        %v525 = vpack.c.bf16 %v333, %v325
        %v526 = vpack.c.bf16 %v334, %v326
        %v527 = vpack.c.bf16 %v335, %v327
        %v528 = vpack.c.bf16 %v336, %v328
        %v529 = vpack.c.bf16 %v337, %v329
        %v530 = vpack.c.bf16 %v338, %v330
        %v531 = vpack.c.bf16 %v347, %v339
        %v532 = vpack.c.bf16 %v348, %v340
        %v533 = vpack.c.bf16 %v349, %v341
        %v534 = vpack.c.bf16 %v350, %v342
        %v535 = vpack.c.bf16 %v351, %v343
        %v536 = vpack.c.bf16 %v352, %v344
        %v537 = vpack.c.bf16 %v353, %v345
        %v538 = vpack.c.bf16 %v354, %v346
        %v539 = vpack.c.bf16 %v363, %v355
        %v540 = vpack.c.bf16 %v364, %v356
        %v541 = vpack.c.bf16 %v365, %v357
        %v542 = vpack.c.bf16 %v366, %v358
        %v543 = vpack.c.bf16 %v367, %v359
        %v544 = vpack.c.bf16 %v368, %v360
        %v545 = vpack.c.bf16 %v369, %v361
        %v546 = vpack.c.bf16 %v370, %v362
        %v547 = vpack.c.bf16 %v379, %v371
        %v548 = vpack.c.bf16 %v380, %v372
        %v549 = vpack.c.bf16 %v381, %v373
        %v550 = vpack.c.bf16 %v382, %v374
        %v551 = vpack.c.bf16 %v383, %v375
        %v552 = vpack.c.bf16 %v384, %v376
        %v553 = vpack.c.bf16 %v385, %v377
        %v554 = vpack.c.bf16 %v386, %v378
        %v555 = vpack.c.bf16 %v395, %v387
        %v556 = vpack.c.bf16 %v396, %v388
        %v557 = vpack.c.bf16 %v397, %v389
        %v558 = vpack.c.bf16 %v398, %v390
        %v559 = vpack.c.bf16 %v399, %v391
        %v560 = vpack.c.bf16 %v400, %v392
        %v561 = vpack.c.bf16 %v401, %v393
        %v562 = vpack.c.bf16 %v402, %v394
        %v563 = vpack.c.bf16 %v411, %v403
        %v564 = vpack.c.bf16 %v412, %v404
        %v565 = vpack.c.bf16 %v413, %v405
        %v566 = vpack.c.bf16 %v414, %v406
        %v567 = vpack.c.bf16 %v415, %v407
        %v568 = vpack.c.bf16 %v416, %v408
        %v569 = vpack.c.bf16 %v417, %v409
        %v570 = vpack.c.bf16 %v418, %v410
        %v571 = vpack.c.bf16 %v427, %v419
        %v572 = vpack.c.bf16 %v428, %v420
        %v573 = vpack.c.bf16 %v429, %v421
        %v574 = vpack.c.bf16 %v430, %v422
        %v575 = vpack.c.bf16 %v431, %v423
        %v576 = vpack.c.bf16 %v432, %v424
        %v577 = vpack.c.bf16 %v433, %v425
        %v578 = vpack.c.bf16 %v434, %v426
        %v579 = vpack.c.bf16 %v443, %v435
        %v580 = vpack.c.bf16 %v444, %v436
        %v581 = vpack.c.bf16 %v445, %v437
        %v582 = vpack.c.bf16 %v446, %v438
        %v583 = vpack.c.bf16 %v447, %v439
        %v584 = vpack.c.bf16 %v448, %v440
        %v585 = vpack.c.bf16 %v449, %v441
        %v586 = vpack.c.bf16 %v450, %v442
        %v587 = vpack.c.bf16 %v459, %v451
        %v588 = vpack.c.bf16 %v460, %v452
        %v589 = vpack.c.bf16 %v461, %v453
        %v590 = vpack.c.bf16 %v462, %v454
        %v591 = vpack.c.bf16 %v463, %v455
        %v592 = vpack.c.bf16 %v464, %v456
        %v593 = vpack.c.bf16 %v465, %v457
        %v594 = vpack.c.bf16 %v466, %v458
        %v595 = vld [vmem:[%s199] sm:$0xff]
        %v596 = vld [vmem:[%s199 + $0x8] sm:$0xff]
        %v597 = vld [vmem:[%s199 + $0x10] sm:$0xff]
        %v598 = vld [vmem:[%s199 + $0x18] sm:$0xff]
        %v599 = vld [vmem:[%s199 + $0x20] sm:$0xff]
        %v600 = vld [vmem:[%s199 + $0x28] sm:$0xff]
        %v601 = vld [vmem:[%s199 + $0x30] sm:$0xff]
        %v602 = vld [vmem:[%s199 + $0x38] sm:$0xff]
        %v603 = vld [vmem:[%s199 + $0x40] sm:$0xff]
        %v604 = vld [vmem:[%s199 + $0x48] sm:$0xff]
        %v605 = vld [vmem:[%s199 + $0x50] sm:$0xff]
        %v606 = vld [vmem:[%s199 + $0x58] sm:$0xff]
        %v607 = vld [vmem:[%s199 + $0x60] sm:$0xff]
        %v608 = vld [vmem:[%s199 + $0x68] sm:$0xff]
        %v609 = vld [vmem:[%s199 + $0x70] sm:$0xff]
        %v610 = vld [vmem:[%s199 + $0x78] sm:$0xff]
        %v611 = vld [vmem:[%s199 + $0x80] sm:$0xff]
        %v612 = vld [vmem:[%s199 + $0x88] sm:$0xff]
        %v613 = vld [vmem:[%s199 + $0x90] sm:$0xff]
        %v614 = vld [vmem:[%s199 + $0x98] sm:$0xff]
        %v615 = vld [vmem:[%s199 + $0xa0] sm:$0xff]
        %v616 = vld [vmem:[%s199 + $0xa8] sm:$0xff]
        %v617 = vld [vmem:[%s199 + $0xb0] sm:$0xff]
        %v618 = vld [vmem:[%s199 + $0xb8] sm:$0xff]
        %v619 = vld [vmem:[%s199 + $0xc0] sm:$0xff]
        %v620 = vld [vmem:[%s199 + $0xc8] sm:$0xff]
        %v621 = vld [vmem:[%s199 + $0xd0] sm:$0xff]
        %v622 = vld [vmem:[%s199 + $0xd8] sm:$0xff]
        %v623 = vld [vmem:[%s199 + $0xe0] sm:$0xff]
        %v624 = vld [vmem:[%s199 + $0xe8] sm:$0xff]
        %v625 = vld [vmem:[%s199 + $0xf0] sm:$0xff]
        %v626 = vld [vmem:[%s199 + $0xf8] sm:$0xff]
        %v627 = vld [vmem:[%s199 + $0x100] sm:$0xff]
        %v628 = vld [vmem:[%s199 + $0x108] sm:$0xff]
        %v629 = vld [vmem:[%s199 + $0x110] sm:$0xff]
        %v630 = vld [vmem:[%s199 + $0x118] sm:$0xff]
        %v631 = vld [vmem:[%s199 + $0x120] sm:$0xff]
        %v632 = vld [vmem:[%s199 + $0x128] sm:$0xff]
        %v633 = vld [vmem:[%s199 + $0x130] sm:$0xff]
        %v634 = vld [vmem:[%s199 + $0x138] sm:$0xff]
        %v635 = vld [vmem:[%s199 + $0x140] sm:$0xff]
        %v636 = vld [vmem:[%s199 + $0x148] sm:$0xff]
        %v637 = vld [vmem:[%s199 + $0x150] sm:$0xff]
        %v638 = vld [vmem:[%s199 + $0x158] sm:$0xff]
        %v639 = vld [vmem:[%s199 + $0x160] sm:$0xff]
        %v640 = vld [vmem:[%s199 + $0x168] sm:$0xff]
        %v641 = vld [vmem:[%s199 + $0x170] sm:$0xff]
        %v642 = vld [vmem:[%s199 + $0x178] sm:$0xff]
        %v643 = vld [vmem:[%s199 + $0x180] sm:$0xff]
        %v644 = vld [vmem:[%s199 + $0x188] sm:$0xff]
        %v645 = vld [vmem:[%s199 + $0x190] sm:$0xff]
        %v646 = vld [vmem:[%s199 + $0x198] sm:$0xff]
        %v647 = vld [vmem:[%s199 + $0x1a0] sm:$0xff]
        %v648 = vld [vmem:[%s199 + $0x1a8] sm:$0xff]
        %v649 = vld [vmem:[%s199 + $0x1b0] sm:$0xff]
        %v650 = vld [vmem:[%s199 + $0x1b8] sm:$0xff]
        %v651 = vld [vmem:[%s199 + $0x1c0] sm:$0xff]
        %v652 = vld [vmem:[%s199 + $0x1c8] sm:$0xff]
        %v653 = vld [vmem:[%s199 + $0x1d0] sm:$0xff]
        %v654 = vld [vmem:[%s199 + $0x1d8] sm:$0xff]
        %v655 = vld [vmem:[%s199 + $0x1e0] sm:$0xff]
        %v656 = vld [vmem:[%s199 + $0x1e8] sm:$0xff]
        %v657 = vld [vmem:[%s199 + $0x1f0] sm:$0xff]
        %v658 = vld [vmem:[%s199 + $0x1f8] sm:$0xff]
        %v659 = vld [vmem:[%s199 + $0x200] sm:$0xff]
        %v660 = vld [vmem:[%s199 + $0x208] sm:$0xff]
        %v661 = vld [vmem:[%s199 + $0x210] sm:$0xff]
        %v662 = vld [vmem:[%s199 + $0x218] sm:$0xff]
        %v663 = vld [vmem:[%s199 + $0x220] sm:$0xff]
        %v664 = vld [vmem:[%s199 + $0x228] sm:$0xff]
        %v665 = vld [vmem:[%s199 + $0x230] sm:$0xff]
        %v666 = vld [vmem:[%s199 + $0x238] sm:$0xff]
        %v667 = vld [vmem:[%s199 + $0x240] sm:$0xff]
        %v668 = vld [vmem:[%s199 + $0x248] sm:$0xff]
        %v669 = vld [vmem:[%s199 + $0x250] sm:$0xff]
        %v670 = vld [vmem:[%s199 + $0x258] sm:$0xff]
        %v671 = vld [vmem:[%s199 + $0x260] sm:$0xff]
        %v672 = vld [vmem:[%s199 + $0x268] sm:$0xff]
        %v673 = vld [vmem:[%s199 + $0x270] sm:$0xff]
        %v674 = vld [vmem:[%s199 + $0x278] sm:$0xff]
        %v675 = vld [vmem:[%s199 + $0x280] sm:$0xff]
        %v676 = vld [vmem:[%s199 + $0x288] sm:$0xff]
        %v677 = vld [vmem:[%s199 + $0x290] sm:$0xff]
        %v678 = vld [vmem:[%s199 + $0x298] sm:$0xff]
        %v679 = vld [vmem:[%s199 + $0x2a0] sm:$0xff]
        %v680 = vld [vmem:[%s199 + $0x2a8] sm:$0xff]
        %v681 = vld [vmem:[%s199 + $0x2b0] sm:$0xff]
        %v682 = vld [vmem:[%s199 + $0x2b8] sm:$0xff]
        %v683 = vld [vmem:[%s199 + $0x2c0] sm:$0xff]
        %v684 = vld [vmem:[%s199 + $0x2c8] sm:$0xff]
        %v685 = vld [vmem:[%s199 + $0x2d0] sm:$0xff]
        %v686 = vld [vmem:[%s199 + $0x2d8] sm:$0xff]
        %v687 = vld [vmem:[%s199 + $0x2e0] sm:$0xff]
        %v688 = vld [vmem:[%s199 + $0x2e8] sm:$0xff]
        %v689 = vld [vmem:[%s199 + $0x2f0] sm:$0xff]
        %v690 = vld [vmem:[%s199 + $0x2f8] sm:$0xff]
        %v691 = vld [vmem:[%s199 + $0x300] sm:$0xff]
        %v692 = vld [vmem:[%s199 + $0x308] sm:$0xff]
        %v693 = vld [vmem:[%s199 + $0x310] sm:$0xff]
        %v694 = vld [vmem:[%s199 + $0x318] sm:$0xff]
        %v695 = vld [vmem:[%s199 + $0x320] sm:$0xff]
        %v696 = vld [vmem:[%s199 + $0x328] sm:$0xff]
        %v697 = vld [vmem:[%s199 + $0x330] sm:$0xff]
        %v698 = vld [vmem:[%s199 + $0x338] sm:$0xff]
        %v699 = vld [vmem:[%s199 + $0x340] sm:$0xff]
        %v700 = vld [vmem:[%s199 + $0x348] sm:$0xff]
        %v701 = vld [vmem:[%s199 + $0x350] sm:$0xff]
        %v702 = vld [vmem:[%s199 + $0x358] sm:$0xff]
        %v703 = vld [vmem:[%s199 + $0x360] sm:$0xff]
        %v704 = vld [vmem:[%s199 + $0x368] sm:$0xff]
        %v705 = vld [vmem:[%s199 + $0x370] sm:$0xff]
        %v706 = vld [vmem:[%s199 + $0x378] sm:$0xff]
        %v707 = vld [vmem:[%s199 + $0x380] sm:$0xff]
        %v708 = vld [vmem:[%s199 + $0x388] sm:$0xff]
        %v709 = vld [vmem:[%s199 + $0x390] sm:$0xff]
        %v710 = vld [vmem:[%s199 + $0x398] sm:$0xff]
        %v711 = vld [vmem:[%s199 + $0x3a0] sm:$0xff]
        %v712 = vld [vmem:[%s199 + $0x3a8] sm:$0xff]
        %v713 = vld [vmem:[%s199 + $0x3b0] sm:$0xff]
        %v714 = vld [vmem:[%s199 + $0x3b8] sm:$0xff]
        %v715 = vld [vmem:[%s199 + $0x3c0] sm:$0xff]
        %v716 = vld [vmem:[%s199 + $0x3c8] sm:$0xff]
        %v717 = vld [vmem:[%s199 + $0x3d0] sm:$0xff]
        %v718 = vld [vmem:[%s199 + $0x3d8] sm:$0xff]
        %v719 = vld [vmem:[%s199 + $0x3e0] sm:$0xff]
        %v720 = vld [vmem:[%s199 + $0x3e8] sm:$0xff]
        %v721 = vld [vmem:[%s199 + $0x3f0] sm:$0xff]
        %v722 = vld [vmem:[%s199 + $0x3f8] sm:$0xff]
        %v723 = vld [vmem:[%s199 + $0x400] sm:$0xff]
        %v724 = vld [vmem:[%s199 + $0x408] sm:$0xff]
        %v725 = vld [vmem:[%s199 + $0x410] sm:$0xff]
        %v726 = vld [vmem:[%s199 + $0x418] sm:$0xff]
        %v727 = vld [vmem:[%s199 + $0x420] sm:$0xff]
        %v728 = vld [vmem:[%s199 + $0x428] sm:$0xff]
        %v729 = vld [vmem:[%s199 + $0x430] sm:$0xff]
        %v730 = vld [vmem:[%s199 + $0x438] sm:$0xff]
        %v731 = vld [vmem:[%s199 + $0x440] sm:$0xff]
        %v732 = vld [vmem:[%s199 + $0x448] sm:$0xff]
        %v733 = vld [vmem:[%s199 + $0x450] sm:$0xff]
        %v734 = vld [vmem:[%s199 + $0x458] sm:$0xff]
        %v735 = vld [vmem:[%s199 + $0x460] sm:$0xff]
        %v736 = vld [vmem:[%s199 + $0x468] sm:$0xff]
        %v737 = vld [vmem:[%s199 + $0x470] sm:$0xff]
        %v738 = vld [vmem:[%s199 + $0x478] sm:$0xff]
        %v739 = vld [vmem:[%s199 + $0x480] sm:$0xff]
        %v740 = vld [vmem:[%s199 + $0x488] sm:$0xff]
        %v741 = vld [vmem:[%s199 + $0x490] sm:$0xff]
        %v742 = vld [vmem:[%s199 + $0x498] sm:$0xff]
        %v743 = vld [vmem:[%s199 + $0x4a0] sm:$0xff]
        %v744 = vld [vmem:[%s199 + $0x4a8] sm:$0xff]
        %v745 = vld [vmem:[%s199 + $0x4b0] sm:$0xff]
        %v746 = vld [vmem:[%s199 + $0x4b8] sm:$0xff]
        %v747 = vld [vmem:[%s199 + $0x4c0] sm:$0xff]
        %v748 = vld [vmem:[%s199 + $0x4c8] sm:$0xff]
        %v749 = vld [vmem:[%s199 + $0x4d0] sm:$0xff]
        %v750 = vld [vmem:[%s199 + $0x4d8] sm:$0xff]
        %v751 = vld [vmem:[%s199 + $0x4e0] sm:$0xff]
        %v752 = vld [vmem:[%s199 + $0x4e8] sm:$0xff]
        %v753 = vld [vmem:[%s199 + $0x4f0] sm:$0xff]
        %v754 = vld [vmem:[%s199 + $0x4f8] sm:$0xff]
        %v755 = vld [vmem:[%s199 + $0x500] sm:$0xff]
        %v756 = vld [vmem:[%s199 + $0x508] sm:$0xff]
        %v757 = vld [vmem:[%s199 + $0x510] sm:$0xff]
        %v758 = vld [vmem:[%s199 + $0x518] sm:$0xff]
        %v759 = vld [vmem:[%s199 + $0x520] sm:$0xff]
        %v760 = vld [vmem:[%s199 + $0x528] sm:$0xff]
        %v761 = vld [vmem:[%s199 + $0x530] sm:$0xff]
        %v762 = vld [vmem:[%s199 + $0x538] sm:$0xff]
        %v763 = vld [vmem:[%s199 + $0x540] sm:$0xff]
        %v764 = vld [vmem:[%s199 + $0x548] sm:$0xff]
        %v765 = vld [vmem:[%s199 + $0x550] sm:$0xff]
        %v766 = vld [vmem:[%s199 + $0x558] sm:$0xff]
        %v767 = vld [vmem:[%s199 + $0x560] sm:$0xff]
        %v768 = vld [vmem:[%s199 + $0x568] sm:$0xff]
        %v769 = vld [vmem:[%s199 + $0x570] sm:$0xff]
        %v770 = vld [vmem:[%s199 + $0x578] sm:$0xff]
        %v771 = vld [vmem:[%s199 + $0x580] sm:$0xff]
        %v772 = vld [vmem:[%s199 + $0x588] sm:$0xff]
        %v773 = vld [vmem:[%s199 + $0x590] sm:$0xff]
        %v774 = vld [vmem:[%s199 + $0x598] sm:$0xff]
        %v775 = vld [vmem:[%s199 + $0x5a0] sm:$0xff]
        %v776 = vld [vmem:[%s199 + $0x5a8] sm:$0xff]
        %v777 = vld [vmem:[%s199 + $0x5b0] sm:$0xff]
        %v778 = vld [vmem:[%s199 + $0x5b8] sm:$0xff]
        %v779 = vld [vmem:[%s199 + $0x5c0] sm:$0xff]
        %v780 = vld [vmem:[%s199 + $0x5c8] sm:$0xff]
        %v781 = vld [vmem:[%s199 + $0x5d0] sm:$0xff]
        %v782 = vld [vmem:[%s199 + $0x5d8] sm:$0xff]
        %v783 = vld [vmem:[%s199 + $0x5e0] sm:$0xff]
        %v784 = vld [vmem:[%s199 + $0x5e8] sm:$0xff]
        %v785 = vld [vmem:[%s199 + $0x5f0] sm:$0xff]
        %v786 = vld [vmem:[%s199 + $0x5f8] sm:$0xff]
        %v787 = vld [vmem:[%s199 + $0x600] sm:$0xff]
        %v788 = vld [vmem:[%s199 + $0x608] sm:$0xff]
        %v789 = vld [vmem:[%s199 + $0x610] sm:$0xff]
        %v790 = vld [vmem:[%s199 + $0x618] sm:$0xff]
        %v791 = vld [vmem:[%s199 + $0x620] sm:$0xff]
        %v792 = vld [vmem:[%s199 + $0x628] sm:$0xff]
        %v793 = vld [vmem:[%s199 + $0x630] sm:$0xff]
        %v794 = vld [vmem:[%s199 + $0x638] sm:$0xff]
        %v795 = vld [vmem:[%s199 + $0x640] sm:$0xff]
        %v796 = vld [vmem:[%s199 + $0x648] sm:$0xff]
        %v797 = vld [vmem:[%s199 + $0x650] sm:$0xff]
        %v798 = vld [vmem:[%s199 + $0x658] sm:$0xff]
        %v799 = vld [vmem:[%s199 + $0x660] sm:$0xff]
        %v800 = vld [vmem:[%s199 + $0x668] sm:$0xff]
        %v801 = vld [vmem:[%s199 + $0x670] sm:$0xff]
        %v802 = vld [vmem:[%s199 + $0x678] sm:$0xff]
        %v803 = vld [vmem:[%s199 + $0x680] sm:$0xff]
        %v804 = vld [vmem:[%s199 + $0x688] sm:$0xff]
        %v805 = vld [vmem:[%s199 + $0x690] sm:$0xff]
        %v806 = vld [vmem:[%s199 + $0x698] sm:$0xff]
        %v807 = vld [vmem:[%s199 + $0x6a0] sm:$0xff]
        %v808 = vld [vmem:[%s199 + $0x6a8] sm:$0xff]
        %v809 = vld [vmem:[%s199 + $0x6b0] sm:$0xff]
        %v810 = vld [vmem:[%s199 + $0x6b8] sm:$0xff]
        %v811 = vld [vmem:[%s199 + $0x6c0] sm:$0xff]
        %v812 = vld [vmem:[%s199 + $0x6c8] sm:$0xff]
        %v813 = vld [vmem:[%s199 + $0x6d0] sm:$0xff]
        %v814 = vld [vmem:[%s199 + $0x6d8] sm:$0xff]
        %v815 = vld [vmem:[%s199 + $0x6e0] sm:$0xff]
        %v816 = vld [vmem:[%s199 + $0x6e8] sm:$0xff]
        %v817 = vld [vmem:[%s199 + $0x6f0] sm:$0xff]
        %v818 = vld [vmem:[%s199 + $0x6f8] sm:$0xff]
        %v819 = vld [vmem:[%s199 + $0x700] sm:$0xff]
        %v820 = vld [vmem:[%s199 + $0x708] sm:$0xff]
        %v821 = vld [vmem:[%s199 + $0x710] sm:$0xff]
        %v822 = vld [vmem:[%s199 + $0x718] sm:$0xff]
        %v823 = vld [vmem:[%s199 + $0x720] sm:$0xff]
        %v824 = vld [vmem:[%s199 + $0x728] sm:$0xff]
        %v825 = vld [vmem:[%s199 + $0x730] sm:$0xff]
        %v826 = vld [vmem:[%s199 + $0x738] sm:$0xff]
        %v827 = vld [vmem:[%s199 + $0x740] sm:$0xff]
        %v828 = vld [vmem:[%s199 + $0x748] sm:$0xff]
        %v829 = vld [vmem:[%s199 + $0x750] sm:$0xff]
        %v830 = vld [vmem:[%s199 + $0x758] sm:$0xff]
        %v831 = vld [vmem:[%s199 + $0x760] sm:$0xff]
        %v832 = vld [vmem:[%s199 + $0x768] sm:$0xff]
        %v833 = vld [vmem:[%s199 + $0x770] sm:$0xff]
        %v834 = vld [vmem:[%s199 + $0x778] sm:$0xff]
        %v835 = vld [vmem:[%s199 + $0x780] sm:$0xff]
        %v836 = vld [vmem:[%s199 + $0x788] sm:$0xff]
        %v837 = vld [vmem:[%s199 + $0x790] sm:$0xff]
        %v838 = vld [vmem:[%s199 + $0x798] sm:$0xff]
        %v839 = vld [vmem:[%s199 + $0x7a0] sm:$0xff]
        %v840 = vld [vmem:[%s199 + $0x7a8] sm:$0xff]
        %v841 = vld [vmem:[%s199 + $0x7b0] sm:$0xff]
        %v842 = vld [vmem:[%s199 + $0x7b8] sm:$0xff]
        %v843 = vld [vmem:[%s199 + $0x7c0] sm:$0xff]
        %v844 = vld [vmem:[%s199 + $0x7c8] sm:$0xff]
        %v845 = vld [vmem:[%s199 + $0x7d0] sm:$0xff]
        %v846 = vld [vmem:[%s199 + $0x7d8] sm:$0xff]
        %v847 = vld [vmem:[%s199 + $0x7e0] sm:$0xff]
        %v848 = vld [vmem:[%s199 + $0x7e8] sm:$0xff]
        %v849 = vld [vmem:[%s199 + $0x7f0] sm:$0xff]
        %v850 = vld [vmem:[%s199 + $0x7f8] sm:$0xff]
        %v851 = vpack.c.bf16 %v597, %v595
        %v852 = vpack.c.bf16 %v598, %v596
        %v853 = vpack.c.bf16 %v601, %v599
        %v854 = vpack.c.bf16 %v602, %v600
        %v855 = vpack.c.bf16 %v605, %v603
        %v856 = vpack.c.bf16 %v606, %v604
        %v857 = vpack.c.bf16 %v609, %v607
        %v858 = vpack.c.bf16 %v610, %v608
        %v859 = vpack.c.bf16 %v613, %v611
        %v860 = vpack.c.bf16 %v614, %v612
        %v861 = vpack.c.bf16 %v617, %v615
        %v862 = vpack.c.bf16 %v618, %v616
        %v863 = vpack.c.bf16 %v621, %v619
        %v864 = vpack.c.bf16 %v622, %v620
        %v865 = vpack.c.bf16 %v625, %v623
        %v866 = vpack.c.bf16 %v626, %v624
        %v867 = vpack.c.bf16 %v629, %v627
        %v868 = vpack.c.bf16 %v630, %v628
        %v869 = vpack.c.bf16 %v633, %v631
        %v870 = vpack.c.bf16 %v634, %v632
        %v871 = vpack.c.bf16 %v637, %v635
        %v872 = vpack.c.bf16 %v638, %v636
        %v873 = vpack.c.bf16 %v641, %v639
        %v874 = vpack.c.bf16 %v642, %v640
        %v875 = vpack.c.bf16 %v645, %v643
        %v876 = vpack.c.bf16 %v646, %v644
        %v877 = vpack.c.bf16 %v649, %v647
        %v878 = vpack.c.bf16 %v650, %v648
        %v879 = vpack.c.bf16 %v653, %v651
        %v880 = vpack.c.bf16 %v654, %v652
        %v881 = vpack.c.bf16 %v657, %v655
        %v882 = vpack.c.bf16 %v658, %v656
        %v883 = vpack.c.bf16 %v661, %v659
        %v884 = vpack.c.bf16 %v662, %v660
        %v885 = vpack.c.bf16 %v665, %v663
        %v886 = vpack.c.bf16 %v666, %v664
        %v887 = vpack.c.bf16 %v669, %v667
        %v888 = vpack.c.bf16 %v670, %v668
        %v889 = vpack.c.bf16 %v673, %v671
        %v890 = vpack.c.bf16 %v674, %v672
        %v891 = vpack.c.bf16 %v677, %v675
        %v892 = vpack.c.bf16 %v678, %v676
        %v893 = vpack.c.bf16 %v681, %v679
        %v894 = vpack.c.bf16 %v682, %v680
        %v895 = vpack.c.bf16 %v685, %v683
        %v896 = vpack.c.bf16 %v686, %v684
        %v897 = vpack.c.bf16 %v689, %v687
        %v898 = vpack.c.bf16 %v690, %v688
        %v899 = vpack.c.bf16 %v693, %v691
        %v900 = vpack.c.bf16 %v694, %v692
        %v901 = vpack.c.bf16 %v697, %v695
        %v902 = vpack.c.bf16 %v698, %v696
        %v903 = vpack.c.bf16 %v701, %v699
        %v904 = vpack.c.bf16 %v702, %v700
        %v905 = vpack.c.bf16 %v705, %v703
        %v906 = vpack.c.bf16 %v706, %v704
        %v907 = vpack.c.bf16 %v709, %v707
        %v908 = vpack.c.bf16 %v710, %v708
        %v909 = vpack.c.bf16 %v713, %v711
        %v910 = vpack.c.bf16 %v714, %v712
        %v911 = vpack.c.bf16 %v717, %v715
        %v912 = vpack.c.bf16 %v718, %v716
        %v913 = vpack.c.bf16 %v721, %v719
        %v914 = vpack.c.bf16 %v722, %v720
        %v915 = vpack.c.bf16 %v725, %v723
        %v916 = vpack.c.bf16 %v726, %v724
        %v917 = vpack.c.bf16 %v729, %v727
        %v918 = vpack.c.bf16 %v730, %v728
        %v919 = vpack.c.bf16 %v733, %v731
        %v920 = vpack.c.bf16 %v734, %v732
        %v921 = vpack.c.bf16 %v737, %v735
        %v922 = vpack.c.bf16 %v738, %v736
        %v923 = vpack.c.bf16 %v741, %v739
        %v924 = vpack.c.bf16 %v742, %v740
        %v925 = vpack.c.bf16 %v745, %v743
        %v926 = vpack.c.bf16 %v746, %v744
        %v927 = vpack.c.bf16 %v749, %v747
        %v928 = vpack.c.bf16 %v750, %v748
        %v929 = vpack.c.bf16 %v753, %v751
        %v930 = vpack.c.bf16 %v754, %v752
        %v931 = vpack.c.bf16 %v757, %v755
        %v932 = vpack.c.bf16 %v758, %v756
        %v933 = vpack.c.bf16 %v761, %v759
        %v934 = vpack.c.bf16 %v762, %v760
        %v935 = vpack.c.bf16 %v765, %v763
        %v936 = vpack.c.bf16 %v766, %v764
        %v937 = vpack.c.bf16 %v769, %v767
        %v938 = vpack.c.bf16 %v770, %v768
        %v939 = vpack.c.bf16 %v773, %v771
        %v940 = vpack.c.bf16 %v774, %v772
        %v941 = vpack.c.bf16 %v777, %v775
        %v942 = vpack.c.bf16 %v778, %v776
        %v943 = vpack.c.bf16 %v781, %v779
        %v944 = vpack.c.bf16 %v782, %v780
        %v945 = vpack.c.bf16 %v785, %v783
        %v946 = vpack.c.bf16 %v786, %v784
        %v947 = vpack.c.bf16 %v789, %v787
        %v948 = vpack.c.bf16 %v790, %v788
        %v949 = vpack.c.bf16 %v793, %v791
        %v950 = vpack.c.bf16 %v794, %v792
        %v951 = vpack.c.bf16 %v797, %v795
        %v952 = vpack.c.bf16 %v798, %v796
        %v953 = vpack.c.bf16 %v801, %v799
        %v954 = vpack.c.bf16 %v802, %v800
        %v955 = vpack.c.bf16 %v805, %v803
        %v956 = vpack.c.bf16 %v806, %v804
        %v957 = vpack.c.bf16 %v809, %v807
        %v958 = vpack.c.bf16 %v810, %v808
        %v959 = vpack.c.bf16 %v813, %v811
        %v960 = vpack.c.bf16 %v814, %v812
        %v961 = vpack.c.bf16 %v817, %v815
        %v962 = vpack.c.bf16 %v818, %v816
        %v963 = vpack.c.bf16 %v821, %v819
        %v964 = vpack.c.bf16 %v822, %v820
        %v965 = vpack.c.bf16 %v825, %v823
        %v966 = vpack.c.bf16 %v826, %v824
        %v967 = vpack.c.bf16 %v829, %v827
        %v968 = vpack.c.bf16 %v830, %v828
        %v969 = vpack.c.bf16 %v833, %v831
        %v970 = vpack.c.bf16 %v834, %v832
        %v971 = vpack.c.bf16 %v837, %v835
        %v972 = vpack.c.bf16 %v838, %v836
        %v973 = vpack.c.bf16 %v841, %v839
        %v974 = vpack.c.bf16 %v842, %v840
        %v975 = vpack.c.bf16 %v845, %v843
        %v976 = vpack.c.bf16 %v846, %v844
        %v977 = vpack.c.bf16 %v849, %v847
        %v978 = vpack.c.bf16 %v850, %v848
        %979 = vmatprep.subr.bf16.mxu0 %v866
        %980 = vmatpush1.bf16.msra.mxu0 %v865
        %981 = vmatprep.subr.bf16.mxu0 %v864
        %982 = vmatpush1.bf16.msra.mxu0 %v863
        %983 = vmatprep.subr.bf16.mxu0 %v862
        %984 = vmatpush1.bf16.msra.mxu0 %v861
        %985 = vmatprep.subr.bf16.mxu0 %v860
        %986 = vmatpush1.bf16.msra.mxu0 %v859
        %987 = vmatprep.subr.bf16.mxu0 %v858
        %988 = vmatpush1.bf16.msra.mxu0 %v857
        %989 = vmatprep.subr.bf16.mxu0 %v856
        %990 = vmatpush1.bf16.msra.mxu0 %v855
        %991 = vmatprep.subr.bf16.mxu0 %v854
        %992 = vmatpush1.bf16.msra.mxu0 %v853
        %993 = vmatprep.subr.bf16.mxu0 %v852
        %994 = vmatpush1.bf16.msra.mxu0 %v851
        %995 = vmatprep.subr.bf16.mxu0 %v882
        %996 = vmatpush2.bf16.msra.mxu0 %v881
        %997 = vmatprep.subr.bf16.mxu0 %v880
        %998 = vmatpush2.bf16.msra.mxu0 %v879
        %999 = vmatprep.subr.bf16.mxu0 %v878
        %1000 = vmatpush2.bf16.msra.mxu0 %v877
        %1001 = vmatprep.subr.bf16.mxu0 %v876
        %1002 = vmatpush2.bf16.msra.mxu0 %v875
        %1003 = vmatprep.subr.bf16.mxu0 %v874
        %1004 = vmatpush2.bf16.msra.mxu0 %v873
        %1005 = vmatprep.subr.bf16.mxu0 %v872
        %1006 = vmatpush2.bf16.msra.mxu0 %v871
        %1007 = vmatprep.subr.bf16.mxu0 %v870
        %1008 = vmatpush2.bf16.msra.mxu0 %v869
        %1009 = vmatprep.subr.bf16.mxu0 %v868
        %1010 = vmatpush2.bf16.msra.mxu0 %v867
        %1011 = vmatprep.mubr.bf16.mxu0 %v468
        %1012 = vmatmul.mubr.bf16.gmra.mxu0 %v467
        %v1013 = vpop.f32.mrf.mxu0
        %v1014 = vadd.f32 0.0, %v1013
        %v1015 = vpop.f32.mrf.mxu0
        %v1016 = vadd.f32 0.0, %v1015
        %v1017 = vpop.f32.mrf.mxu0
        %v1018 = vadd.f32 0.0, %v1017
        %v1019 = vpop.f32.mrf.mxu0
        %v1020 = vadd.f32 0.0, %v1019
        %1021 = vmatprep.mubr.bf16.mxu0 %v476
        %1022 = vmatmul.mubr.bf16.gmra.mxu0 %v475
        %v1023 = vpop.f32.mrf.mxu0
        %v1024 = vadd.f32 0.0, %v1023
        %v1025 = vpop.f32.mrf.mxu0
        %v1026 = vadd.f32 0.0, %v1025
        %v1027 = vpop.f32.mrf.mxu0
        %v1028 = vadd.f32 0.0, %v1027
        %v1029 = vpop.f32.mrf.mxu0
        %v1030 = vadd.f32 0.0, %v1029
        %1031 = vmatprep.mubr.bf16.mxu0 %v484
        %1032 = vmatmul.mubr.bf16.gmra.mxu0 %v483
        %v1033 = vpop.f32.mrf.mxu0
        %v1034 = vadd.f32 0.0, %v1033
        %v1035 = vpop.f32.mrf.mxu0
        %v1036 = vadd.f32 0.0, %v1035
        %v1037 = vpop.f32.mrf.mxu0
        %v1038 = vadd.f32 0.0, %v1037
        %v1039 = vpop.f32.mrf.mxu0
        %v1040 = vadd.f32 0.0, %v1039
        %1041 = vmatprep.mubr.bf16.mxu0 %v492
        %1042 = vmatmul.mubr.bf16.gmra.mxu0 %v491
        %v1043 = vpop.f32.mrf.mxu0
        %v1044 = vadd.f32 0.0, %v1043
        %v1045 = vpop.f32.mrf.mxu0
        %v1046 = vadd.f32 0.0, %v1045
        %v1047 = vpop.f32.mrf.mxu0
        %v1048 = vadd.f32 0.0, %v1047
        %v1049 = vpop.f32.mrf.mxu0
        %v1050 = vadd.f32 0.0, %v1049
        %1051 = vmatprep.mubr.bf16.mxu0 %v500
        %1052 = vmatmul.mubr.bf16.gmra.mxu0 %v499
        %v1053 = vpop.f32.mrf.mxu0
        %v1054 = vadd.f32 0.0, %v1053
        %v1055 = vpop.f32.mrf.mxu0
        %v1056 = vadd.f32 0.0, %v1055
        %v1057 = vpop.f32.mrf.mxu0
        %v1058 = vadd.f32 0.0, %v1057
        %v1059 = vpop.f32.mrf.mxu0
        %v1060 = vadd.f32 0.0, %v1059
        %1061 = vmatprep.mubr.bf16.mxu0 %v508
        %1062 = vmatmul.mubr.bf16.gmra.mxu0 %v507
        %v1063 = vpop.f32.mrf.mxu0
        %v1064 = vadd.f32 0.0, %v1063
        %v1065 = vpop.f32.mrf.mxu0
        %v1066 = vadd.f32 0.0, %v1065
        %v1067 = vpop.f32.mrf.mxu0
        %v1068 = vadd.f32 0.0, %v1067
        %v1069 = vpop.f32.mrf.mxu0
        %v1070 = vadd.f32 0.0, %v1069
        %1071 = vmatprep.mubr.bf16.mxu0 %v516
        %1072 = vmatmul.mubr.bf16.gmra.mxu0 %v515
        %v1073 = vpop.f32.mrf.mxu0
        %v1074 = vadd.f32 0.0, %v1073
        %v1075 = vpop.f32.mrf.mxu0
        %v1076 = vadd.f32 0.0, %v1075
        %v1077 = vpop.f32.mrf.mxu0
        %v1078 = vadd.f32 0.0, %v1077
        %v1079 = vpop.f32.mrf.mxu0
        %v1080 = vadd.f32 0.0, %v1079
        %1081 = vmatprep.mubr.bf16.mxu0 %v524
        %1082 = vmatmul.mubr.bf16.gmra.mxu0 %v523
        %v1083 = vpop.f32.mrf.mxu0
        %v1084 = vadd.f32 0.0, %v1083
        %v1085 = vpop.f32.mrf.mxu0
        %v1086 = vadd.f32 0.0, %v1085
        %v1087 = vpop.f32.mrf.mxu0
        %v1088 = vadd.f32 0.0, %v1087
        %v1089 = vpop.f32.mrf.mxu0
        %v1090 = vadd.f32 0.0, %v1089
        %1091 = vmatprep.mubr.bf16.mxu0 %v532
        %1092 = vmatmul.mubr.bf16.gmra.mxu0 %v531
        %v1093 = vpop.f32.mrf.mxu0
        %v1094 = vadd.f32 0.0, %v1093
        %v1095 = vpop.f32.mrf.mxu0
        %v1096 = vadd.f32 0.0, %v1095
        %v1097 = vpop.f32.mrf.mxu0
        %v1098 = vadd.f32 0.0, %v1097
        %v1099 = vpop.f32.mrf.mxu0
        %v1100 = vadd.f32 0.0, %v1099
        %1101 = vmatprep.mubr.bf16.mxu0 %v540
        %1102 = vmatmul.mubr.bf16.gmra.mxu0 %v539
        %v1103 = vpop.f32.mrf.mxu0
        %v1104 = vadd.f32 0.0, %v1103
        %v1105 = vpop.f32.mrf.mxu0
        %v1106 = vadd.f32 0.0, %v1105
        %v1107 = vpop.f32.mrf.mxu0
        %v1108 = vadd.f32 0.0, %v1107
        %v1109 = vpop.f32.mrf.mxu0
        %v1110 = vadd.f32 0.0, %v1109
        %1111 = vmatprep.mubr.bf16.mxu0 %v548
        %1112 = vmatmul.mubr.bf16.gmra.mxu0 %v547
        %v1113 = vpop.f32.mrf.mxu0
        %v1114 = vadd.f32 0.0, %v1113
        %v1115 = vpop.f32.mrf.mxu0
        %v1116 = vadd.f32 0.0, %v1115
        %v1117 = vpop.f32.mrf.mxu0
        %v1118 = vadd.f32 0.0, %v1117
        %v1119 = vpop.f32.mrf.mxu0
        %v1120 = vadd.f32 0.0, %v1119
        %1121 = vmatprep.mubr.bf16.mxu0 %v556
        %1122 = vmatmul.mubr.bf16.gmra.mxu0 %v555
        %v1123 = vpop.f32.mrf.mxu0
        %v1124 = vadd.f32 0.0, %v1123
        %v1125 = vpop.f32.mrf.mxu0
        %v1126 = vadd.f32 0.0, %v1125
        %v1127 = vpop.f32.mrf.mxu0
        %v1128 = vadd.f32 0.0, %v1127
        %v1129 = vpop.f32.mrf.mxu0
        %v1130 = vadd.f32 0.0, %v1129
        %1131 = vmatprep.mubr.bf16.mxu0 %v564
        %1132 = vmatmul.mubr.bf16.gmra.mxu0 %v563
        %v1133 = vpop.f32.mrf.mxu0
        %v1134 = vadd.f32 0.0, %v1133
        %v1135 = vpop.f32.mrf.mxu0
        %v1136 = vadd.f32 0.0, %v1135
        %v1137 = vpop.f32.mrf.mxu0
        %v1138 = vadd.f32 0.0, %v1137
        %v1139 = vpop.f32.mrf.mxu0
        %v1140 = vadd.f32 0.0, %v1139
        %1141 = vmatprep.mubr.bf16.mxu0 %v572
        %1142 = vmatmul.mubr.bf16.gmra.mxu0 %v571
        %v1143 = vpop.f32.mrf.mxu0
        %v1144 = vadd.f32 0.0, %v1143
        %v1145 = vpop.f32.mrf.mxu0
        %v1146 = vadd.f32 0.0, %v1145
        %v1147 = vpop.f32.mrf.mxu0
        %v1148 = vadd.f32 0.0, %v1147
        %v1149 = vpop.f32.mrf.mxu0
        %v1150 = vadd.f32 0.0, %v1149
        %1151 = vmatprep.mubr.bf16.mxu0 %v580
        %1152 = vmatmul.mubr.bf16.gmra.mxu0 %v579
        %v1153 = vpop.f32.mrf.mxu0
        %v1154 = vadd.f32 0.0, %v1153
        %v1155 = vpop.f32.mrf.mxu0
        %v1156 = vadd.f32 0.0, %v1155
        %v1157 = vpop.f32.mrf.mxu0
        %v1158 = vadd.f32 0.0, %v1157
        %v1159 = vpop.f32.mrf.mxu0
        %v1160 = vadd.f32 0.0, %v1159
        %1161 = vmatprep.mubr.bf16.mxu0 %v588
        %1162 = vmatmul.mubr.bf16.gmra.mxu0 %v587
        %v1163 = vpop.f32.mrf.mxu0
        %v1164 = vadd.f32 0.0, %v1163
        %v1165 = vpop.f32.mrf.mxu0
        %v1166 = vadd.f32 0.0, %v1165
        %v1167 = vpop.f32.mrf.mxu0
        %v1168 = vadd.f32 0.0, %v1167
        %v1169 = vpop.f32.mrf.mxu0
        %v1170 = vadd.f32 0.0, %v1169
        %1171 = vdwg.mxu0
        %1172 = vmatprep.subr.bf16.mxu0 %v898
        %1173 = vmatpush1.bf16.msra.mxu0 %v897
        %1174 = vmatprep.subr.bf16.mxu0 %v896
        %1175 = vmatpush1.bf16.msra.mxu0 %v895
        %1176 = vmatprep.subr.bf16.mxu0 %v894
        %1177 = vmatpush1.bf16.msra.mxu0 %v893
        %1178 = vmatprep.subr.bf16.mxu0 %v892
        %1179 = vmatpush1.bf16.msra.mxu0 %v891
        %1180 = vmatprep.subr.bf16.mxu0 %v890
        %1181 = vmatpush1.bf16.msra.mxu0 %v889
        %1182 = vmatprep.subr.bf16.mxu0 %v888
        %1183 = vmatpush1.bf16.msra.mxu0 %v887
        %1184 = vmatprep.subr.bf16.mxu0 %v886
        %1185 = vmatpush1.bf16.msra.mxu0 %v885
        %1186 = vmatprep.subr.bf16.mxu0 %v884
        %1187 = vmatpush1.bf16.msra.mxu0 %v883
        %1188 = vmatprep.subr.bf16.mxu0 %v914
        %1189 = vmatpush2.bf16.msra.mxu0 %v913
        %1190 = vmatprep.subr.bf16.mxu0 %v912
        %1191 = vmatpush2.bf16.msra.mxu0 %v911
        %1192 = vmatprep.subr.bf16.mxu0 %v910
        %1193 = vmatpush2.bf16.msra.mxu0 %v909
        %1194 = vmatprep.subr.bf16.mxu0 %v908
        %1195 = vmatpush2.bf16.msra.mxu0 %v907
        %1196 = vmatprep.subr.bf16.mxu0 %v906
        %1197 = vmatpush2.bf16.msra.mxu0 %v905
        %1198 = vmatprep.subr.bf16.mxu0 %v904
        %1199 = vmatpush2.bf16.msra.mxu0 %v903
        %1200 = vmatprep.subr.bf16.mxu0 %v902
        %1201 = vmatpush2.bf16.msra.mxu0 %v901
        %1202 = vmatprep.subr.bf16.mxu0 %v900
        %1203 = vmatpush2.bf16.msra.mxu0 %v899
        %1204 = vmatprep.mubr.bf16.mxu0 %v470
        %1205 = vmatmul.mubr.bf16.gmra.mxu0 %v469
        %v1206 = vpop.f32.mrf.mxu0
        %v1207 = vadd.f32 %v1014, %v1206
        %v1208 = vpop.f32.mrf.mxu0
        %v1209 = vadd.f32 %v1016, %v1208
        %v1210 = vpop.f32.mrf.mxu0
        %v1211 = vadd.f32 %v1018, %v1210
        %v1212 = vpop.f32.mrf.mxu0
        %v1213 = vadd.f32 %v1020, %v1212
        %1214 = vmatprep.mubr.bf16.mxu0 %v478
        %1215 = vmatmul.mubr.bf16.gmra.mxu0 %v477
        %v1216 = vpop.f32.mrf.mxu0
        %v1217 = vadd.f32 %v1024, %v1216
        %v1218 = vpop.f32.mrf.mxu0
        %v1219 = vadd.f32 %v1026, %v1218
        %v1220 = vpop.f32.mrf.mxu0
        %v1221 = vadd.f32 %v1028, %v1220
        %v1222 = vpop.f32.mrf.mxu0
        %v1223 = vadd.f32 %v1030, %v1222
        %1224 = vmatprep.mubr.bf16.mxu0 %v486
        %1225 = vmatmul.mubr.bf16.gmra.mxu0 %v485
        %v1226 = vpop.f32.mrf.mxu0
        %v1227 = vadd.f32 %v1034, %v1226
        %v1228 = vpop.f32.mrf.mxu0
        %v1229 = vadd.f32 %v1036, %v1228
        %v1230 = vpop.f32.mrf.mxu0
        %v1231 = vadd.f32 %v1038, %v1230
        %v1232 = vpop.f32.mrf.mxu0
        %v1233 = vadd.f32 %v1040, %v1232
        %1234 = vmatprep.mubr.bf16.mxu0 %v494
        %1235 = vmatmul.mubr.bf16.gmra.mxu0 %v493
        %v1236 = vpop.f32.mrf.mxu0
        %v1237 = vadd.f32 %v1044, %v1236
        %v1238 = vpop.f32.mrf.mxu0
        %v1239 = vadd.f32 %v1046, %v1238
        %v1240 = vpop.f32.mrf.mxu0
        %v1241 = vadd.f32 %v1048, %v1240
        %v1242 = vpop.f32.mrf.mxu0
        %v1243 = vadd.f32 %v1050, %v1242
        %1244 = vmatprep.mubr.bf16.mxu0 %v502
        %1245 = vmatmul.mubr.bf16.gmra.mxu0 %v501
        %v1246 = vpop.f32.mrf.mxu0
        %v1247 = vadd.f32 %v1054, %v1246
        %v1248 = vpop.f32.mrf.mxu0
        %v1249 = vadd.f32 %v1056, %v1248
        %v1250 = vpop.f32.mrf.mxu0
        %v1251 = vadd.f32 %v1058, %v1250
        %v1252 = vpop.f32.mrf.mxu0
        %v1253 = vadd.f32 %v1060, %v1252
        %1254 = vmatprep.mubr.bf16.mxu0 %v510
        %1255 = vmatmul.mubr.bf16.gmra.mxu0 %v509
        %v1256 = vpop.f32.mrf.mxu0
        %v1257 = vadd.f32 %v1064, %v1256
        %v1258 = vpop.f32.mrf.mxu0
        %v1259 = vadd.f32 %v1066, %v1258
        %v1260 = vpop.f32.mrf.mxu0
        %v1261 = vadd.f32 %v1068, %v1260
        %v1262 = vpop.f32.mrf.mxu0
        %v1263 = vadd.f32 %v1070, %v1262
        %1264 = vmatprep.mubr.bf16.mxu0 %v518
        %1265 = vmatmul.mubr.bf16.gmra.mxu0 %v517
        %v1266 = vpop.f32.mrf.mxu0
        %v1267 = vadd.f32 %v1074, %v1266
        %v1268 = vpop.f32.mrf.mxu0
        %v1269 = vadd.f32 %v1076, %v1268
        %v1270 = vpop.f32.mrf.mxu0
        %v1271 = vadd.f32 %v1078, %v1270
        %v1272 = vpop.f32.mrf.mxu0
        %v1273 = vadd.f32 %v1080, %v1272
        %1274 = vmatprep.mubr.bf16.mxu0 %v526
        %1275 = vmatmul.mubr.bf16.gmra.mxu0 %v525
        %v1276 = vpop.f32.mrf.mxu0
        %v1277 = vadd.f32 %v1084, %v1276
        %v1278 = vpop.f32.mrf.mxu0
        %v1279 = vadd.f32 %v1086, %v1278
        %v1280 = vpop.f32.mrf.mxu0
        %v1281 = vadd.f32 %v1088, %v1280
        %v1282 = vpop.f32.mrf.mxu0
        %v1283 = vadd.f32 %v1090, %v1282
        %1284 = vmatprep.mubr.bf16.mxu0 %v534
        %1285 = vmatmul.mubr.bf16.gmra.mxu0 %v533
        %v1286 = vpop.f32.mrf.mxu0
        %v1287 = vadd.f32 %v1094, %v1286
        %v1288 = vpop.f32.mrf.mxu0
        %v1289 = vadd.f32 %v1096, %v1288
        %v1290 = vpop.f32.mrf.mxu0
        %v1291 = vadd.f32 %v1098, %v1290
        %v1292 = vpop.f32.mrf.mxu0
        %v1293 = vadd.f32 %v1100, %v1292
        %1294 = vmatprep.mubr.bf16.mxu0 %v542
        %1295 = vmatmul.mubr.bf16.gmra.mxu0 %v541
        %v1296 = vpop.f32.mrf.mxu0
        %v1297 = vadd.f32 %v1104, %v1296
        %v1298 = vpop.f32.mrf.mxu0
        %v1299 = vadd.f32 %v1106, %v1298
        %v1300 = vpop.f32.mrf.mxu0
        %v1301 = vadd.f32 %v1108, %v1300
        %v1302 = vpop.f32.mrf.mxu0
        %v1303 = vadd.f32 %v1110, %v1302
        %1304 = vmatprep.mubr.bf16.mxu0 %v550
        %1305 = vmatmul.mubr.bf16.gmra.mxu0 %v549
        %v1306 = vpop.f32.mrf.mxu0
        %v1307 = vadd.f32 %v1114, %v1306
        %v1308 = vpop.f32.mrf.mxu0
        %v1309 = vadd.f32 %v1116, %v1308
        %v1310 = vpop.f32.mrf.mxu0
        %v1311 = vadd.f32 %v1118, %v1310
        %v1312 = vpop.f32.mrf.mxu0
        %v1313 = vadd.f32 %v1120, %v1312
        %1314 = vmatprep.mubr.bf16.mxu0 %v558
        %1315 = vmatmul.mubr.bf16.gmra.mxu0 %v557
        %v1316 = vpop.f32.mrf.mxu0
        %v1317 = vadd.f32 %v1124, %v1316
        %v1318 = vpop.f32.mrf.mxu0
        %v1319 = vadd.f32 %v1126, %v1318
        %v1320 = vpop.f32.mrf.mxu0
        %v1321 = vadd.f32 %v1128, %v1320
        %v1322 = vpop.f32.mrf.mxu0
        %v1323 = vadd.f32 %v1130, %v1322
        %1324 = vmatprep.mubr.bf16.mxu0 %v566
        %1325 = vmatmul.mubr.bf16.gmra.mxu0 %v565
        %v1326 = vpop.f32.mrf.mxu0
        %v1327 = vadd.f32 %v1134, %v1326
        %v1328 = vpop.f32.mrf.mxu0
        %v1329 = vadd.f32 %v1136, %v1328
        %v1330 = vpop.f32.mrf.mxu0
        %v1331 = vadd.f32 %v1138, %v1330
        %v1332 = vpop.f32.mrf.mxu0
        %v1333 = vadd.f32 %v1140, %v1332
        %1334 = vmatprep.mubr.bf16.mxu0 %v574
        %1335 = vmatmul.mubr.bf16.gmra.mxu0 %v573
        %v1336 = vpop.f32.mrf.mxu0
        %v1337 = vadd.f32 %v1144, %v1336
        %v1338 = vpop.f32.mrf.mxu0
        %v1339 = vadd.f32 %v1146, %v1338
        %v1340 = vpop.f32.mrf.mxu0
        %v1341 = vadd.f32 %v1148, %v1340
        %v1342 = vpop.f32.mrf.mxu0
        %v1343 = vadd.f32 %v1150, %v1342
        %1344 = vmatprep.mubr.bf16.mxu0 %v582
        %1345 = vmatmul.mubr.bf16.gmra.mxu0 %v581
        %v1346 = vpop.f32.mrf.mxu0
        %v1347 = vadd.f32 %v1154, %v1346
        %v1348 = vpop.f32.mrf.mxu0
        %v1349 = vadd.f32 %v1156, %v1348
        %v1350 = vpop.f32.mrf.mxu0
        %v1351 = vadd.f32 %v1158, %v1350
        %v1352 = vpop.f32.mrf.mxu0
        %v1353 = vadd.f32 %v1160, %v1352
        %1354 = vmatprep.mubr.bf16.mxu0 %v590
        %1355 = vmatmul.mubr.bf16.gmra.mxu0 %v589
        %v1356 = vpop.f32.mrf.mxu0
        %v1357 = vadd.f32 %v1164, %v1356
        %v1358 = vpop.f32.mrf.mxu0
        %v1359 = vadd.f32 %v1166, %v1358
        %v1360 = vpop.f32.mrf.mxu0
        %v1361 = vadd.f32 %v1168, %v1360
        %v1362 = vpop.f32.mrf.mxu0
        %v1363 = vadd.f32 %v1170, %v1362
        %1364 = vdwg.mxu0
        %1365 = vmatprep.subr.bf16.mxu0 %v930
        %1366 = vmatpush1.bf16.msra.mxu0 %v929
        %1367 = vmatprep.subr.bf16.mxu0 %v928
        %1368 = vmatpush1.bf16.msra.mxu0 %v927
        %1369 = vmatprep.subr.bf16.mxu0 %v926
        %1370 = vmatpush1.bf16.msra.mxu0 %v925
        %1371 = vmatprep.subr.bf16.mxu0 %v924
        %1372 = vmatpush1.bf16.msra.mxu0 %v923
        %1373 = vmatprep.subr.bf16.mxu0 %v922
        %1374 = vmatpush1.bf16.msra.mxu0 %v921
        %1375 = vmatprep.subr.bf16.mxu0 %v920
        %1376 = vmatpush1.bf16.msra.mxu0 %v919
        %1377 = vmatprep.subr.bf16.mxu0 %v918
        %1378 = vmatpush1.bf16.msra.mxu0 %v917
        %1379 = vmatprep.subr.bf16.mxu0 %v916
        %1380 = vmatpush1.bf16.msra.mxu0 %v915
        %1381 = vmatprep.subr.bf16.mxu0 %v946
        %1382 = vmatpush2.bf16.msra.mxu0 %v945
        %1383 = vmatprep.subr.bf16.mxu0 %v944
        %1384 = vmatpush2.bf16.msra.mxu0 %v943
        %1385 = vmatprep.subr.bf16.mxu0 %v942
        %1386 = vmatpush2.bf16.msra.mxu0 %v941
        %1387 = vmatprep.subr.bf16.mxu0 %v940
        %1388 = vmatpush2.bf16.msra.mxu0 %v939
        %1389 = vmatprep.subr.bf16.mxu0 %v938
        %1390 = vmatpush2.bf16.msra.mxu0 %v937
        %1391 = vmatprep.subr.bf16.mxu0 %v936
        %1392 = vmatpush2.bf16.msra.mxu0 %v935
        %1393 = vmatprep.subr.bf16.mxu0 %v934
        %1394 = vmatpush2.bf16.msra.mxu0 %v933
        %1395 = vmatprep.subr.bf16.mxu0 %v932
        %1396 = vmatpush2.bf16.msra.mxu0 %v931
        %1397 = vmatprep.mubr.bf16.mxu0 %v472
        %1398 = vmatmul.mubr.bf16.gmra.mxu0 %v471
        %v1399 = vpop.f32.mrf.mxu0
        %v1400 = vadd.f32 %v1207, %v1399
        %v1401 = vpop.f32.mrf.mxu0
        %v1402 = vadd.f32 %v1209, %v1401
        %v1403 = vpop.f32.mrf.mxu0
        %v1404 = vadd.f32 %v1211, %v1403
        %v1405 = vpop.f32.mrf.mxu0
        %v1406 = vadd.f32 %v1213, %v1405
        %1407 = vmatprep.mubr.bf16.mxu0 %v480
        %1408 = vmatmul.mubr.bf16.gmra.mxu0 %v479
        %v1409 = vpop.f32.mrf.mxu0
        %v1410 = vadd.f32 %v1217, %v1409
        %v1411 = vpop.f32.mrf.mxu0
        %v1412 = vadd.f32 %v1219, %v1411
        %v1413 = vpop.f32.mrf.mxu0
        %v1414 = vadd.f32 %v1221, %v1413
        %v1415 = vpop.f32.mrf.mxu0
        %v1416 = vadd.f32 %v1223, %v1415
        %1417 = vmatprep.mubr.bf16.mxu0 %v488
        %1418 = vmatmul.mubr.bf16.gmra.mxu0 %v487
        %v1419 = vpop.f32.mrf.mxu0
        %v1420 = vadd.f32 %v1227, %v1419
        %v1421 = vpop.f32.mrf.mxu0
        %v1422 = vadd.f32 %v1229, %v1421
        %v1423 = vpop.f32.mrf.mxu0
        %v1424 = vadd.f32 %v1231, %v1423
        %v1425 = vpop.f32.mrf.mxu0
        %v1426 = vadd.f32 %v1233, %v1425
        %1427 = vmatprep.mubr.bf16.mxu0 %v496
        %1428 = vmatmul.mubr.bf16.gmra.mxu0 %v495
        %v1429 = vpop.f32.mrf.mxu0
        %v1430 = vadd.f32 %v1237, %v1429
        %v1431 = vpop.f32.mrf.mxu0
        %v1432 = vadd.f32 %v1239, %v1431
        %v1433 = vpop.f32.mrf.mxu0
        %v1434 = vadd.f32 %v1241, %v1433
        %v1435 = vpop.f32.mrf.mxu0
        %v1436 = vadd.f32 %v1243, %v1435
        %1437 = vmatprep.mubr.bf16.mxu0 %v504
        %1438 = vmatmul.mubr.bf16.gmra.mxu0 %v503
        %v1439 = vpop.f32.mrf.mxu0
        %v1440 = vadd.f32 %v1247, %v1439
        %v1441 = vpop.f32.mrf.mxu0
        %v1442 = vadd.f32 %v1249, %v1441
        %v1443 = vpop.f32.mrf.mxu0
        %v1444 = vadd.f32 %v1251, %v1443
        %v1445 = vpop.f32.mrf.mxu0
        %v1446 = vadd.f32 %v1253, %v1445
        %1447 = vmatprep.mubr.bf16.mxu0 %v512
        %1448 = vmatmul.mubr.bf16.gmra.mxu0 %v511
        %v1449 = vpop.f32.mrf.mxu0
        %v1450 = vadd.f32 %v1257, %v1449
        %v1451 = vpop.f32.mrf.mxu0
        %v1452 = vadd.f32 %v1259, %v1451
        %v1453 = vpop.f32.mrf.mxu0
        %v1454 = vadd.f32 %v1261, %v1453
        %v1455 = vpop.f32.mrf.mxu0
        %v1456 = vadd.f32 %v1263, %v1455
        %1457 = vmatprep.mubr.bf16.mxu0 %v520
        %1458 = vmatmul.mubr.bf16.gmra.mxu0 %v519
        %v1459 = vpop.f32.mrf.mxu0
        %v1460 = vadd.f32 %v1267, %v1459
        %v1461 = vpop.f32.mrf.mxu0
        %v1462 = vadd.f32 %v1269, %v1461
        %v1463 = vpop.f32.mrf.mxu0
        %v1464 = vadd.f32 %v1271, %v1463
        %v1465 = vpop.f32.mrf.mxu0
        %v1466 = vadd.f32 %v1273, %v1465
        %1467 = vmatprep.mubr.bf16.mxu0 %v528
        %1468 = vmatmul.mubr.bf16.gmra.mxu0 %v527
        %v1469 = vpop.f32.mrf.mxu0
        %v1470 = vadd.f32 %v1277, %v1469
        %v1471 = vpop.f32.mrf.mxu0
        %v1472 = vadd.f32 %v1279, %v1471
        %v1473 = vpop.f32.mrf.mxu0
        %v1474 = vadd.f32 %v1281, %v1473
        %v1475 = vpop.f32.mrf.mxu0
        %v1476 = vadd.f32 %v1283, %v1475
        %1477 = vmatprep.mubr.bf16.mxu0 %v536
        %1478 = vmatmul.mubr.bf16.gmra.mxu0 %v535
        %v1479 = vpop.f32.mrf.mxu0
        %v1480 = vadd.f32 %v1287, %v1479
        %v1481 = vpop.f32.mrf.mxu0
        %v1482 = vadd.f32 %v1289, %v1481
        %v1483 = vpop.f32.mrf.mxu0
        %v1484 = vadd.f32 %v1291, %v1483
        %v1485 = vpop.f32.mrf.mxu0
        %v1486 = vadd.f32 %v1293, %v1485
        %1487 = vmatprep.mubr.bf16.mxu0 %v544
        %1488 = vmatmul.mubr.bf16.gmra.mxu0 %v543
        %v1489 = vpop.f32.mrf.mxu0
        %v1490 = vadd.f32 %v1297, %v1489
        %v1491 = vpop.f32.mrf.mxu0
        %v1492 = vadd.f32 %v1299, %v1491
        %v1493 = vpop.f32.mrf.mxu0
        %v1494 = vadd.f32 %v1301, %v1493
        %v1495 = vpop.f32.mrf.mxu0
        %v1496 = vadd.f32 %v1303, %v1495
        %1497 = vmatprep.mubr.bf16.mxu0 %v552
        %1498 = vmatmul.mubr.bf16.gmra.mxu0 %v551
        %v1499 = vpop.f32.mrf.mxu0
        %v1500 = vadd.f32 %v1307, %v1499
        %v1501 = vpop.f32.mrf.mxu0
        %v1502 = vadd.f32 %v1309, %v1501
        %v1503 = vpop.f32.mrf.mxu0
        %v1504 = vadd.f32 %v1311, %v1503
        %v1505 = vpop.f32.mrf.mxu0
        %v1506 = vadd.f32 %v1313, %v1505
        %1507 = vmatprep.mubr.bf16.mxu0 %v560
        %1508 = vmatmul.mubr.bf16.gmra.mxu0 %v559
        %v1509 = vpop.f32.mrf.mxu0
        %v1510 = vadd.f32 %v1317, %v1509
        %v1511 = vpop.f32.mrf.mxu0
        %v1512 = vadd.f32 %v1319, %v1511
        %v1513 = vpop.f32.mrf.mxu0
        %v1514 = vadd.f32 %v1321, %v1513
        %v1515 = vpop.f32.mrf.mxu0
        %v1516 = vadd.f32 %v1323, %v1515
        %1517 = vmatprep.mubr.bf16.mxu0 %v568
        %1518 = vmatmul.mubr.bf16.gmra.mxu0 %v567
        %v1519 = vpop.f32.mrf.mxu0
        %v1520 = vadd.f32 %v1327, %v1519
        %v1521 = vpop.f32.mrf.mxu0
        %v1522 = vadd.f32 %v1329, %v1521
        %v1523 = vpop.f32.mrf.mxu0
        %v1524 = vadd.f32 %v1331, %v1523
        %v1525 = vpop.f32.mrf.mxu0
        %v1526 = vadd.f32 %v1333, %v1525
        %1527 = vmatprep.mubr.bf16.mxu0 %v576
        %1528 = vmatmul.mubr.bf16.gmra.mxu0 %v575
        %v1529 = vpop.f32.mrf.mxu0
        %v1530 = vadd.f32 %v1337, %v1529
        %v1531 = vpop.f32.mrf.mxu0
        %v1532 = vadd.f32 %v1339, %v1531
        %v1533 = vpop.f32.mrf.mxu0
        %v1534 = vadd.f32 %v1341, %v1533
        %v1535 = vpop.f32.mrf.mxu0
        %v1536 = vadd.f32 %v1343, %v1535
        %1537 = vmatprep.mubr.bf16.mxu0 %v584
        %1538 = vmatmul.mubr.bf16.gmra.mxu0 %v583
        %v1539 = vpop.f32.mrf.mxu0
        %v1540 = vadd.f32 %v1347, %v1539
        %v1541 = vpop.f32.mrf.mxu0
        %v1542 = vadd.f32 %v1349, %v1541
        %v1543 = vpop.f32.mrf.mxu0
        %v1544 = vadd.f32 %v1351, %v1543
        %v1545 = vpop.f32.mrf.mxu0
        %v1546 = vadd.f32 %v1353, %v1545
        %1547 = vmatprep.mubr.bf16.mxu0 %v592
        %1548 = vmatmul.mubr.bf16.gmra.mxu0 %v591
        %v1549 = vpop.f32.mrf.mxu0
        %v1550 = vadd.f32 %v1357, %v1549
        %v1551 = vpop.f32.mrf.mxu0
        %v1552 = vadd.f32 %v1359, %v1551
        %v1553 = vpop.f32.mrf.mxu0
        %v1554 = vadd.f32 %v1361, %v1553
        %v1555 = vpop.f32.mrf.mxu0
        %v1556 = vadd.f32 %v1363, %v1555
        %1557 = vdwg.mxu0
        %1558 = vmatprep.subr.bf16.mxu0 %v962
        %1559 = vmatpush1.bf16.msra.mxu0 %v961
        %1560 = vmatprep.subr.bf16.mxu0 %v960
        %1561 = vmatpush1.bf16.msra.mxu0 %v959
        %1562 = vmatprep.subr.bf16.mxu0 %v958
        %1563 = vmatpush1.bf16.msra.mxu0 %v957
        %1564 = vmatprep.subr.bf16.mxu0 %v956
        %1565 = vmatpush1.bf16.msra.mxu0 %v955
        %1566 = vmatprep.subr.bf16.mxu0 %v954
        %1567 = vmatpush1.bf16.msra.mxu0 %v953
        %1568 = vmatprep.subr.bf16.mxu0 %v952
        %1569 = vmatpush1.bf16.msra.mxu0 %v951
        %1570 = vmatprep.subr.bf16.mxu0 %v950
        %1571 = vmatpush1.bf16.msra.mxu0 %v949
        %1572 = vmatprep.subr.bf16.mxu0 %v948
        %1573 = vmatpush1.bf16.msra.mxu0 %v947
        %1574 = vmatprep.subr.bf16.mxu0 %v978
        %1575 = vmatpush2.bf16.msra.mxu0 %v977
        %1576 = vmatprep.subr.bf16.mxu0 %v976
        %1577 = vmatpush2.bf16.msra.mxu0 %v975
        %1578 = vmatprep.subr.bf16.mxu0 %v974
        %1579 = vmatpush2.bf16.msra.mxu0 %v973
        %1580 = vmatprep.subr.bf16.mxu0 %v972
        %1581 = vmatpush2.bf16.msra.mxu0 %v971
        %1582 = vmatprep.subr.bf16.mxu0 %v970
        %1583 = vmatpush2.bf16.msra.mxu0 %v969
        %1584 = vmatprep.subr.bf16.mxu0 %v968
        %1585 = vmatpush2.bf16.msra.mxu0 %v967
        %1586 = vmatprep.subr.bf16.mxu0 %v966
        %1587 = vmatpush2.bf16.msra.mxu0 %v965
        %1588 = vmatprep.subr.bf16.mxu0 %v964
        %1589 = vmatpush2.bf16.msra.mxu0 %v963
        %1590 = vmatprep.mubr.bf16.mxu0 %v474
        %1591 = vmatmul.mubr.bf16.gmra.mxu0 %v473
        %v1592 = vpop.f32.mrf.mxu0
        %v1593 = vadd.f32 %v1400, %v1592
        %v1594 = vpop.f32.mrf.mxu0
        %v1595 = vadd.f32 %v1402, %v1594
        %v1596 = vpop.f32.mrf.mxu0
        %v1597 = vadd.f32 %v1404, %v1596
        %v1598 = vpop.f32.mrf.mxu0
        %v1599 = vadd.f32 %v1406, %v1598
        %1600 = vmatprep.mubr.bf16.mxu0 %v482
        %1601 = vmatmul.mubr.bf16.gmra.mxu0 %v481
        %v1602 = vpop.f32.mrf.mxu0
        %v1603 = vadd.f32 %v1410, %v1602
        %v1604 = vpop.f32.mrf.mxu0
        %v1605 = vadd.f32 %v1412, %v1604
        %v1606 = vpop.f32.mrf.mxu0
        %v1607 = vadd.f32 %v1414, %v1606
        %v1608 = vpop.f32.mrf.mxu0
        %v1609 = vadd.f32 %v1416, %v1608
        %1610 = vmatprep.mubr.bf16.mxu0 %v490
        %1611 = vmatmul.mubr.bf16.gmra.mxu0 %v489
        %v1612 = vpop.f32.mrf.mxu0
        %v1613 = vadd.f32 %v1420, %v1612
        %v1614 = vpop.f32.mrf.mxu0
        %v1615 = vadd.f32 %v1422, %v1614
        %v1616 = vpop.f32.mrf.mxu0
        %v1617 = vadd.f32 %v1424, %v1616
        %v1618 = vpop.f32.mrf.mxu0
        %v1619 = vadd.f32 %v1426, %v1618
        %1620 = vmatprep.mubr.bf16.mxu0 %v498
        %1621 = vmatmul.mubr.bf16.gmra.mxu0 %v497
        %v1622 = vpop.f32.mrf.mxu0
        %v1623 = vadd.f32 %v1430, %v1622
        %v1624 = vpop.f32.mrf.mxu0
        %v1625 = vadd.f32 %v1432, %v1624
        %v1626 = vpop.f32.mrf.mxu0
        %v1627 = vadd.f32 %v1434, %v1626
        %v1628 = vpop.f32.mrf.mxu0
        %v1629 = vadd.f32 %v1436, %v1628
        %1630 = vmatprep.mubr.bf16.mxu0 %v506
        %1631 = vmatmul.mubr.bf16.gmra.mxu0 %v505
        %v1632 = vpop.f32.mrf.mxu0
        %v1633 = vadd.f32 %v1440, %v1632
        %v1634 = vpop.f32.mrf.mxu0
        %v1635 = vadd.f32 %v1442, %v1634
        %v1636 = vpop.f32.mrf.mxu0
        %v1637 = vadd.f32 %v1444, %v1636
        %v1638 = vpop.f32.mrf.mxu0
        %v1639 = vadd.f32 %v1446, %v1638
        %1640 = vmatprep.mubr.bf16.mxu0 %v514
        %1641 = vmatmul.mubr.bf16.gmra.mxu0 %v513
        %v1642 = vpop.f32.mrf.mxu0
        %v1643 = vadd.f32 %v1450, %v1642
        %v1644 = vpop.f32.mrf.mxu0
        %v1645 = vadd.f32 %v1452, %v1644
        %v1646 = vpop.f32.mrf.mxu0
        %v1647 = vadd.f32 %v1454, %v1646
        %v1648 = vpop.f32.mrf.mxu0
        %v1649 = vadd.f32 %v1456, %v1648
        %1650 = vmatprep.mubr.bf16.mxu0 %v522
        %1651 = vmatmul.mubr.bf16.gmra.mxu0 %v521
        %v1652 = vpop.f32.mrf.mxu0
        %v1653 = vadd.f32 %v1460, %v1652
        %v1654 = vpop.f32.mrf.mxu0
        %v1655 = vadd.f32 %v1462, %v1654
        %v1656 = vpop.f32.mrf.mxu0
        %v1657 = vadd.f32 %v1464, %v1656
        %v1658 = vpop.f32.mrf.mxu0
        %v1659 = vadd.f32 %v1466, %v1658
        %1660 = vmatprep.mubr.bf16.mxu0 %v530
        %1661 = vmatmul.mubr.bf16.gmra.mxu0 %v529
        %v1662 = vpop.f32.mrf.mxu0
        %v1663 = vadd.f32 %v1470, %v1662
        %v1664 = vpop.f32.mrf.mxu0
        %v1665 = vadd.f32 %v1472, %v1664
        %v1666 = vpop.f32.mrf.mxu0
        %v1667 = vadd.f32 %v1474, %v1666
        %v1668 = vpop.f32.mrf.mxu0
        %v1669 = vadd.f32 %v1476, %v1668
        %1670 = vmatprep.mubr.bf16.mxu0 %v538
        %1671 = vmatmul.mubr.bf16.gmra.mxu0 %v537
        %v1672 = vpop.f32.mrf.mxu0
        %v1673 = vadd.f32 %v1480, %v1672
        %v1674 = vpop.f32.mrf.mxu0
        %v1675 = vadd.f32 %v1482, %v1674
        %v1676 = vpop.f32.mrf.mxu0
        %v1677 = vadd.f32 %v1484, %v1676
        %v1678 = vpop.f32.mrf.mxu0
        %v1679 = vadd.f32 %v1486, %v1678
        %1680 = vmatprep.mubr.bf16.mxu0 %v546
        %1681 = vmatmul.mubr.bf16.gmra.mxu0 %v545
        %v1682 = vpop.f32.mrf.mxu0
        %v1683 = vadd.f32 %v1490, %v1682
        %v1684 = vpop.f32.mrf.mxu0
        %v1685 = vadd.f32 %v1492, %v1684
        %v1686 = vpop.f32.mrf.mxu0
        %v1687 = vadd.f32 %v1494, %v1686
        %v1688 = vpop.f32.mrf.mxu0
        %v1689 = vadd.f32 %v1496, %v1688
        %1690 = vmatprep.mubr.bf16.mxu0 %v554
        %1691 = vmatmul.mubr.bf16.gmra.mxu0 %v553
        %v1692 = vpop.f32.mrf.mxu0
        %v1693 = vadd.f32 %v1500, %v1692
        %v1694 = vpop.f32.mrf.mxu0
        %v1695 = vadd.f32 %v1502, %v1694
        %v1696 = vpop.f32.mrf.mxu0
        %v1697 = vadd.f32 %v1504, %v1696
        %v1698 = vpop.f32.mrf.mxu0
        %v1699 = vadd.f32 %v1506, %v1698
        %1700 = vmatprep.mubr.bf16.mxu0 %v562
        %1701 = vmatmul.mubr.bf16.gmra.mxu0 %v561
        %v1702 = vpop.f32.mrf.mxu0
        %v1703 = vadd.f32 %v1510, %v1702
        %v1704 = vpop.f32.mrf.mxu0
        %v1705 = vadd.f32 %v1512, %v1704
        %v1706 = vpop.f32.mrf.mxu0
        %v1707 = vadd.f32 %v1514, %v1706
        %v1708 = vpop.f32.mrf.mxu0
        %v1709 = vadd.f32 %v1516, %v1708
        %1710 = vmatprep.mubr.bf16.mxu0 %v570
        %1711 = vmatmul.mubr.bf16.gmra.mxu0 %v569
        %v1712 = vpop.f32.mrf.mxu0
        %v1713 = vadd.f32 %v1520, %v1712
        %v1714 = vpop.f32.mrf.mxu0
        %v1715 = vadd.f32 %v1522, %v1714
        %v1716 = vpop.f32.mrf.mxu0
        %v1717 = vadd.f32 %v1524, %v1716
        %v1718 = vpop.f32.mrf.mxu0
        %v1719 = vadd.f32 %v1526, %v1718
        %1720 = vmatprep.mubr.bf16.mxu0 %v578
        %1721 = vmatmul.mubr.bf16.gmra.mxu0 %v577
        %v1722 = vpop.f32.mrf.mxu0
        %v1723 = vadd.f32 %v1530, %v1722
        %v1724 = vpop.f32.mrf.mxu0
        %v1725 = vadd.f32 %v1532, %v1724
        %v1726 = vpop.f32.mrf.mxu0
        %v1727 = vadd.f32 %v1534, %v1726
        %v1728 = vpop.f32.mrf.mxu0
        %v1729 = vadd.f32 %v1536, %v1728
        %1730 = vmatprep.mubr.bf16.mxu0 %v586
        %1731 = vmatmul.mubr.bf16.gmra.mxu0 %v585
        %v1732 = vpop.f32.mrf.mxu0
        %v1733 = vadd.f32 %v1540, %v1732
        %v1734 = vpop.f32.mrf.mxu0
        %v1735 = vadd.f32 %v1542, %v1734
        %v1736 = vpop.f32.mrf.mxu0
        %v1737 = vadd.f32 %v1544, %v1736
        %v1738 = vpop.f32.mrf.mxu0
        %v1739 = vadd.f32 %v1546, %v1738
        %1740 = vmatprep.mubr.bf16.mxu0 %v594
        %1741 = vmatmul.mubr.bf16.gmra.mxu0 %v593
        %v1742 = vpop.f32.mrf.mxu0
        %v1743 = vadd.f32 %v1550, %v1742
        %v1744 = vpop.f32.mrf.mxu0
        %v1745 = vadd.f32 %v1552, %v1744
        %v1746 = vpop.f32.mrf.mxu0
        %v1747 = vadd.f32 %v1554, %v1746
        %v1748 = vpop.f32.mrf.mxu0
        %v1749 = vadd.f32 %v1556, %v1748
        %1750 = vdwg.mxu0
        %1751 = vst [vmem:[%s209] sm:$0xff] %v1593
        %vm1752 = vcmask 556032
        %1753 = vst.msk [vmem:[%s209 + $0x8] sm:$0xff] %vm1752, %v1595
        %1754 = vst [vmem:[%s209 + $0x10] sm:$0xff] %v1597
        %1755 = vst.msk [vmem:[%s209 + $0x18] sm:$0xff] %vm1752, %v1599
        %1756 = vst [vmem:[%s209 + $0x20] sm:$0xff] %v1603
        %1757 = vst.msk [vmem:[%s209 + $0x28] sm:$0xff] %vm1752, %v1605
        %1758 = vst [vmem:[%s209 + $0x30] sm:$0xff] %v1607
        %1759 = vst.msk [vmem:[%s209 + $0x38] sm:$0xff] %vm1752, %v1609
        %1760 = vst [vmem:[%s209 + $0x40] sm:$0xff] %v1613
        %1761 = vst.msk [vmem:[%s209 + $0x48] sm:$0xff] %vm1752, %v1615
        %1762 = vst [vmem:[%s209 + $0x50] sm:$0xff] %v1617
        %1763 = vst.msk [vmem:[%s209 + $0x58] sm:$0xff] %vm1752, %v1619
        %1764 = vst [vmem:[%s209 + $0x60] sm:$0xff] %v1623
        %1765 = vst.msk [vmem:[%s209 + $0x68] sm:$0xff] %vm1752, %v1625
        %1766 = vst [vmem:[%s209 + $0x70] sm:$0xff] %v1627
        %1767 = vst.msk [vmem:[%s209 + $0x78] sm:$0xff] %vm1752, %v1629
        %1768 = vst [vmem:[%s209 + $0x80] sm:$0xff] %v1633
        %1769 = vst.msk [vmem:[%s209 + $0x88] sm:$0xff] %vm1752, %v1635
        %1770 = vst [vmem:[%s209 + $0x90] sm:$0xff] %v1637
        %1771 = vst.msk [vmem:[%s209 + $0x98] sm:$0xff] %vm1752, %v1639
        %1772 = vst [vmem:[%s209 + $0xa0] sm:$0xff] %v1643
        %1773 = vst.msk [vmem:[%s209 + $0xa8] sm:$0xff] %vm1752, %v1645
        %1774 = vst [vmem:[%s209 + $0xb0] sm:$0xff] %v1647
        %1775 = vst.msk [vmem:[%s209 + $0xb8] sm:$0xff] %vm1752, %v1649
        %1776 = vst [vmem:[%s209 + $0xc0] sm:$0xff] %v1653
        %1777 = vst.msk [vmem:[%s209 + $0xc8] sm:$0xff] %vm1752, %v1655
        %1778 = vst [vmem:[%s209 + $0xd0] sm:$0xff] %v1657
        %1779 = vst.msk [vmem:[%s209 + $0xd8] sm:$0xff] %vm1752, %v1659
        %1780 = vst [vmem:[%s209 + $0xe0] sm:$0xff] %v1663
        %1781 = vst.msk [vmem:[%s209 + $0xe8] sm:$0xff] %vm1752, %v1665
        %1782 = vst [vmem:[%s209 + $0xf0] sm:$0xff] %v1667
        %1783 = vst.msk [vmem:[%s209 + $0xf8] sm:$0xff] %vm1752, %v1669
        %1784 = vst [vmem:[%s209 + $0x100] sm:$0xff] %v1673
        %1785 = vst.msk [vmem:[%s209 + $0x108] sm:$0xff] %vm1752, %v1675
        %1786 = vst [vmem:[%s209 + $0x110] sm:$0xff] %v1677
        %1787 = vst.msk [vmem:[%s209 + $0x118] sm:$0xff] %vm1752, %v1679
        %1788 = vst [vmem:[%s209 + $0x120] sm:$0xff] %v1683
        %1789 = vst.msk [vmem:[%s209 + $0x128] sm:$0xff] %vm1752, %v1685
        %1790 = vst [vmem:[%s209 + $0x130] sm:$0xff] %v1687
        %1791 = vst.msk [vmem:[%s209 + $0x138] sm:$0xff] %vm1752, %v1689
        %1792 = vst [vmem:[%s209 + $0x140] sm:$0xff] %v1693
        %1793 = vst.msk [vmem:[%s209 + $0x148] sm:$0xff] %vm1752, %v1695
        %1794 = vst [vmem:[%s209 + $0x150] sm:$0xff] %v1697
        %1795 = vst.msk [vmem:[%s209 + $0x158] sm:$0xff] %vm1752, %v1699
        %1796 = vst [vmem:[%s209 + $0x160] sm:$0xff] %v1703
        %1797 = vst.msk [vmem:[%s209 + $0x168] sm:$0xff] %vm1752, %v1705
        %1798 = vst [vmem:[%s209 + $0x170] sm:$0xff] %v1707
        %1799 = vst.msk [vmem:[%s209 + $0x178] sm:$0xff] %vm1752, %v1709
        %1800 = vst [vmem:[%s209 + $0x180] sm:$0xff] %v1713
        %1801 = vst.msk [vmem:[%s209 + $0x188] sm:$0xff] %vm1752, %v1715
        %1802 = vst [vmem:[%s209 + $0x190] sm:$0xff] %v1717
        %1803 = vst.msk [vmem:[%s209 + $0x198] sm:$0xff] %vm1752, %v1719
        %1804 = vst [vmem:[%s209 + $0x1a0] sm:$0xff] %v1723
        %1805 = vst.msk [vmem:[%s209 + $0x1a8] sm:$0xff] %vm1752, %v1725
        %1806 = vst [vmem:[%s209 + $0x1b0] sm:$0xff] %v1727
        %1807 = vst.msk [vmem:[%s209 + $0x1b8] sm:$0xff] %vm1752, %v1729
        %1808 = vst [vmem:[%s209 + $0x1c0] sm:$0xff] %v1733
        %1809 = vst.msk [vmem:[%s209 + $0x1c8] sm:$0xff] %vm1752, %v1735
        %1810 = vst [vmem:[%s209 + $0x1d0] sm:$0xff] %v1737
        %1811 = vst.msk [vmem:[%s209 + $0x1d8] sm:$0xff] %vm1752, %v1739
        %1812 = vst [vmem:[%s209 + $0x1e0] sm:$0xff] %v1743
        %1813 = vst.msk [vmem:[%s209 + $0x1e8] sm:$0xff] %vm1752, %v1745
        %1814 = vst [vmem:[%s209 + $0x1f0] sm:$0xff] %v1747
        %1815 = vst.msk [vmem:[%s209 + $0x1f8] sm:$0xff] %vm1752, %v1749
        %s1816 = smul.u32 32, %s21
        %p1817 = scmp.lt.s32.totalorder %s20, 0
        %s1818 = scalar_select %p1817, %s20, 0
        %p1819 = scmp.lt.s32.totalorder %s1816, 63
        %s1820 = scalar_select %p1819, %s1816, 63
        %s1821 = smul.addr %s1820, 2
        %s1822 = smul.addr %s1818, 128
        %s1823 = sadd.s32 %s1821, %s1822
        %s1824 = smul.addr %s1823, 8
        %s1825 = scalar_lea.vmem %s2, %s1824
        // Predicated region
        $region33: #{tpu_custom_call.1} parent=27 // pred_check
          %p1826 = pneg %p100
        $region34: #{tpu_custom_call.1} parent=27 // pred_check_branch
          %1828 = sbr.rel (%p1826) target = $region36
        $region35: #{tpu_custom_call.1} parent=27 // pred_region
          %s1829 = smul.u32 32, %s21
        $region36: #{tpu_custom_call.1} parent=27 // pred_fallthru
          _
      $region28: #{tpu_custom_call.1} parent=5 // pred_fallthru
        _
      %p1830 = scmp.le.s32.totalorder 2, %s11
      // Predicated region
      $region37: #{tpu_custom_call.1} parent=5 // pred_check
        %p1831 = pneg %p1830
      $region38: #{tpu_custom_call.1} parent=5 // pred_check_branch
        %1833 = sbr.rel (%p1831) target = $region40
      $region39: #{tpu_custom_call.1} parent=5 // pred_region
        %s1834 = ssub.s32 %s11, 2
        // Predicated region
        $region41: #{tpu_custom_call.1} parent=39 // pred_check
          %p1835 = pneg %p106
        $region42: #{tpu_custom_call.1} parent=39 // pred_check_branch
          %1837 = sbr.rel (%p1835) target = $region44
        $region43: #{tpu_custom_call.1} parent=39 // pred_region
          %s1838 = smul.u32 32, %s23
          %p1839 = scmp.lt.s32.totalorder %s22, 0
          %s1840 = scalar_select %p1839, %s22, 0
          %p1841 = scmp.lt.s32.totalorder %s1838, 63
          %s1842 = scalar_select %p1841, %s1838, 63
          %s1843 = smul.addr %s1842, 2
          %s1844 = smul.addr %s1840, 128
          %s1845 = sadd.s32 %s1843, %s1844
          %s1846 = smul.addr %s1845, 8
          %s1847 = scalar_lea.vmem %s2, %s1846
        $region44: #{tpu_custom_call.1} parent=39 // pred_fallthru
          _
      $region40: #{tpu_custom_call.1} parent=5 // pred_fallthru
        _
    $region6: #{tpu_custom_call.1} parent=1 // loop_footer
      %s15 = sadd.s32 1, %s11
    $region7: #{tpu_custom_call.1} parent=1 // loop_footer_branch
      %10 = sbr.rel target = $region3
    $region8: #{tpu_custom_call.1} parent=1 // loop_exit
      _
    %1848 = vsyncpa [#allocation3], 1
    %s1849 = scalar_lea.sflag [#allocation3], 1
    %1850 = vsyncpa %s1849, 1

</llo_original>
